<compile_context>
chip_gen: v7x
topology: tpu7x:2x2x1
jax: 0.10.0
libtpu: 0.0.40
codegen_flags: <defaults>
</compile_context>

<pallas_src>
import functools

import jax
import jax.numpy as jnp
from jax import lax
from jax.experimental import pallas as pl
from jax.experimental.pallas import tpu as pltpu


def down_kernel(x_ref, w1_ref, b1_ref, w2_ref, b2_ref, o_ref, *, Hp, Wp):
    Wpad = Wp + 2                 # padded row length (1-pixel conv halo on each side)
    L = Hp * Wpad                 # slab rows: each output row keeps its 2 wrap-around columns

    # ---- MaxPool2d(2): the 4 pool taps were space-to-depth'd onto the leading axis; the spatial
    # dims are flat and already zero-halo-padded, so the conv1 zero halo comes for free. ----
    pooled = jnp.max(x_ref[...], axis=0)                          # (P, Cin) bf16

    def conv3x3_bn_relu(src, w_ref, b_ref):
        # im2col: the 9 taps are CONTIGUOUS row-offset slices of the flat padded buffer,
        # concatenated along the lane (contraction) axis -> one MXU matmul with K = 9*C.
        patch = jnp.concatenate(
            [src[dy * Wpad + dx: dy * Wpad + dx + L, :]
             for dy in range(3) for dx in range(3)], axis=-1)     # (L, 9*C) bf16
        acc = jnp.dot(patch, w_ref[...], preferred_element_type=jnp.float32)   # (L, C_out) f32
        return jnp.maximum(acc + b_ref[...], 0.0)                 # BN folded: scale in w, bias here

    h = conv3x3_bn_relu(pooled, w1_ref, b1_ref)                   # (L, Cmid) f32

    # Slab rows with x >= Wp are wrap-around garbage; zeroing them is exactly the zero halo
    # *columns* that conv2 needs, so one masked select replaces any per-step scratch zero-fill.
    col = lax.broadcasted_iota(jnp.int32, (L, 1), 0) % Wpad
    h = jnp.where(col < Wp, h, 0.0)

    # Re-align to the padded flat layout: (Wpad+1) zero rows on each side == top/bottom halo rows
    # plus the first/last halo column.  Length becomes P again.
    h_pad = jnp.pad(h.astype(jnp.bfloat16), ((Wpad + 1, Wpad + 1), (0, 0)))    # (P, Cmid) bf16

    out = conv3x3_bn_relu(h_pad, w2_ref, b2_ref)                  # (L, Cout) f32

    # Contiguous store of the full slab (no in-kernel relayout); the wrapper drops the two
    # garbage columns per row with a cheap XLA slice.
    o_ref[...] = out.astype(o_ref.dtype)


def down_forward(x_nchw, w1_hwio, s1, b1, w2_hwio, s2, b2):
    """x_nchw: (N, Cin, H, W) float32. Returns (N, Cout, H/2, W/2) float32 (PyTorch convention)."""
    N, Cin, H, W = x_nchw.shape
    Hp, Wp = H // 2, W // 2
    Cmid, Cout = w1_hwio.shape[-1], w2_hwio.shape[-1]
    Wpad = Wp + 2
    L = Hp * Wpad
    P = (Hp + 2) * Wpad + 2       # flat padded spatial length (+2 so the last tap slice fits)

    # Glue: NCHW -> NHWC -> space-to-depth (pool taps on a leading axis) -> zero halo -> flat, bf16.
    x_nhwc = jnp.transpose(x_nchw, (0, 2, 3, 1))
    x_s2d = (x_nhwc.reshape(N, Hp, 2, Wp, 2, Cin)
             .transpose(0, 2, 4, 1, 3, 5).reshape(N, 4, Hp, Wp, Cin))
    x_pad = jnp.pad(x_s2d, ((0, 0), (0, 0), (1, 1), (1, 1), (0, 0)))
    x_flat = jnp.pad(x_pad.reshape(N, 4, (Hp + 2) * Wpad, Cin),
                     ((0, 0), (0, 0), (0, 2), (0, 0))).astype(jnp.bfloat16)    # (N, 4, P, Cin)

    # Fold the BN scale into the conv weights (eval mode); fold the 9 taps into the contraction dim.
    w1f = (w1_hwio * s1[None, None, None, :]).reshape(9 * Cin, Cmid).astype(jnp.bfloat16)
    w2f = (w2_hwio * s2[None, None, None, :]).reshape(9 * Cmid, Cout).astype(jnp.bfloat16)
    b1_2d = b1.reshape(1, Cmid).astype(jnp.float32)
    b2_2d = b2.reshape(1, Cout).astype(jnp.float32)

    kernel = functools.partial(down_kernel, Hp=Hp, Wp=Wp)

    slab = pl.pallas_call(
        kernel,
        out_shape=jax.ShapeDtypeStruct((N, L, Cout), jnp.float32),
        grid=(N,),
        in_specs=[
            pl.BlockSpec((None, 4, P, Cin), lambda n: (n, 0, 0, 0)),
            pl.BlockSpec((9 * Cin, Cmid), lambda n: (0, 0)),
            pl.BlockSpec((1, Cmid), lambda n: (0, 0)),
            pl.BlockSpec((9 * Cmid, Cout), lambda n: (0, 0)),
            pl.BlockSpec((1, Cout), lambda n: (0, 0)),
        ],
        out_specs=pl.BlockSpec((None, L, Cout), lambda n: (n, 0, 0)),
        compiler_params=pltpu.CompilerParams(
            dimension_semantics=("parallel",),        # images are independent (uses both v7x TCs)
            vmem_limit_bytes=32 * 1024 * 1024,        # explicit scoped-VMEM limit (safe on v5e/v6e/v7x)
        ),
    )(x_flat, w1f, b1_2d, w2f, b2_2d)

    # Drop the 2 wrap-around columns per row and return NCHW to match PyTorch.
    out_nhwc = slab.reshape(N, Hp, Wpad, Cout)[:, :, :Wp, :]
    return jnp.transpose(out_nhwc, (0, 3, 1, 2))


def ref_down(x, w1_hwio, s1, b1, w2_hwio, s2, b2):
    """Pure-JAX reference (NCHW, matches PyTorch Down in eval mode), full f32."""
    p = lax.reduce_window(x, -jnp.inf, lax.max, (1, 1, 2, 2), (1, 1, 2, 2), "VALID")
    dn = ("NCHW", "HWIO", "NCHW")
    h = lax.conv_general_dilated(p, w1_hwio, (1, 1), "SAME", dimension_numbers=dn,
                                 precision=lax.Precision.HIGHEST)
    h = jnp.maximum(h * s1[None, :, None, None] + b1[None, :, None, None], 0.0)
    o = lax.conv_general_dilated(h, w2_hwio, (1, 1), "SAME", dimension_numbers=dn,
                                 precision=lax.Precision.HIGHEST)
    return jnp.maximum(o * s2[None, :, None, None] + b2[None, :, None, None], 0.0)


if __name__ == "__main__":
    N, Cin, H, W = 2, 4, 16, 16
    Cmid = Cout = 8  # Down(in_channels=4, out_channels=8); DoubleConv mid_channels defaults to out

    key = jax.random.PRNGKey(0)
    ks = jax.random.split(key, 12)

    # Conv weights stored HWIO = (3, 3, Cin, Cout); PyTorch OIHW would be w.transpose(2, 3, 1, 0).
    w1 = jax.random.normal(ks[0], (3, 3, Cin, Cmid), jnp.float32) * 0.2
    w2 = jax.random.normal(ks[1], (3, 3, Cmid, Cout), jnp.float32) * 0.2

    # BatchNorm (eval mode): gamma, beta, running_mean, running_var -> folded scale/bias
    eps = 1e-5
    g1 = 1.0 + 0.1 * jax.random.normal(ks[2], (Cmid,), jnp.float32)
    be1 = 0.1 * jax.random.normal(ks[3], (Cmid,), jnp.float32)
    m1 = 0.1 * jax.random.normal(ks[4], (Cmid,), jnp.float32)
    v1 = 1.0 + 0.1 * jnp.abs(jax.random.normal(ks[5], (Cmid,), jnp.float32))
    s1 = g1 / jnp.sqrt(v1 + eps)
    b1 = be1 - m1 * s1

    g2 = 1.0 + 0.1 * jax.random.normal(ks[6], (Cout,), jnp.float32)
    be2 = 0.1 * jax.random.normal(ks[7], (Cout,), jnp.float32)
    m2 = 0.1 * jax.random.normal(ks[8], (Cout,), jnp.float32)
    v2 = 1.0 + 0.1 * jnp.abs(jax.random.normal(ks[9], (Cout,), jnp.float32))
    s2 = g2 / jnp.sqrt(v2 + eps)
    b2 = be2 - m2 * s2

    x = jax.random.normal(ks[10], (N, Cin, H, W), jnp.float32)

    out = jax.block_until_ready(down_forward(x, w1, s1, b1, w2, s2, b2))
    ref = jax.block_until_ready(ref_down(x, w1, s1, b1, w2, s2, b2))

    assert out.shape == (N, Cout, H // 2, W // 2), out.shape
    # atol accounts for bf16 matmul operands (f32 accumulation) vs. the full-f32 reference.
    assert jnp.allclose(out, ref, rtol=2e-2, atol=5e-2), float(jnp.max(jnp.abs(out - ref)))
    print("KERNEL_OK")
</pallas_src>

<mosaic_0001>
module attributes {stable_mosaic.version = 11 : i64} {
  func.func @down_kernel(%arg0: i32, %arg1: memref<1x4x102x4xbf16, #tpu.memory_space<vmem>>, %arg2: memref<36x8xbf16, #tpu.memory_space<vmem>>, %arg3: memref<1x8xf32, #tpu.memory_space<vmem>>, %arg4: memref<72x8xbf16, #tpu.memory_space<vmem>>, %arg5: memref<1x8xf32, #tpu.memory_space<vmem>>, %arg6: memref<1x80x8xf32, #tpu.memory_space<vmem>>) attributes {dimension_semantics = [#tpu.dimension_semantics<parallel>], iteration_bounds = array<i64: 2>, scalar_prefetch = 0 : i64, scratch_operands = 0 : i64, tpu.core_type = #tpu.core_type<tc>, window_params = [{transform_indices = @transform_0, window_bounds = array<i64: 1, 4, 102, 4>}, {pipeline_mode = #tpu.pipeline_mode<synchronous>, transform_indices = @transform_1, window_bounds = array<i64: 36, 8>}, {pipeline_mode = #tpu.pipeline_mode<synchronous>, transform_indices = @transform_2, window_bounds = array<i64: 1, 8>}, {pipeline_mode = #tpu.pipeline_mode<synchronous>, transform_indices = @transform_3, window_bounds = array<i64: 72, 8>}, {pipeline_mode = #tpu.pipeline_mode<synchronous>, transform_indices = @transform_4, window_bounds = array<i64: 1, 8>}, {transform_indices = @transform_5, window_bounds = array<i64: 1, 80, 8>}]} {
    %c0 = arith.constant 0 : index
    %c0_0 = arith.constant 0 : index
    %c0_1 = arith.constant 0 : index
    %c0_2 = arith.constant 0 : index
    %0 = vector.load %arg1[%c0, %c0_0, %c0_1, %c0_2] : memref<1x4x102x4xbf16, #tpu.memory_space<vmem>>, vector<1x4x102x4xbf16>
    %1 = vector.shape_cast %0 : vector<1x4x102x4xbf16> to vector<4x102x4xbf16>
    %cst = arith.constant dense<0xFF80> : vector<102x4xbf16>
    %2 = vector.multi_reduction <maximumf>, %1, %cst [0] : vector<4x102x4xbf16> to vector<102x4xbf16>
    %3 = vector.extract_strided_slice %2 {offsets = [0, 0], sizes = [80, 4], strides = [1, 1]} : vector<102x4xbf16> to vector<80x4xbf16>
    %4 = vector.extract_strided_slice %2 {offsets = [1, 0], sizes = [80, 4], strides = [1, 1]} : vector<102x4xbf16> to vector<80x4xbf16>
    %5 = vector.extract_strided_slice %2 {offsets = [2, 0], sizes = [80, 4], strides = [1, 1]} : vector<102x4xbf16> to vector<80x4xbf16>
    %6 = vector.extract_strided_slice %2 {offsets = [10, 0], sizes = [80, 4], strides = [1, 1]} : vector<102x4xbf16> to vector<80x4xbf16>
    %7 = vector.extract_strided_slice %2 {offsets = [11, 0], sizes = [80, 4], strides = [1, 1]} : vector<102x4xbf16> to vector<80x4xbf16>
    %8 = vector.extract_strided_slice %2 {offsets = [12, 0], sizes = [80, 4], strides = [1, 1]} : vector<102x4xbf16> to vector<80x4xbf16>
    %9 = vector.extract_strided_slice %2 {offsets = [20, 0], sizes = [80, 4], strides = [1, 1]} : vector<102x4xbf16> to vector<80x4xbf16>
    %10 = vector.extract_strided_slice %2 {offsets = [21, 0], sizes = [80, 4], strides = [1, 1]} : vector<102x4xbf16> to vector<80x4xbf16>
    %11 = vector.extract_strided_slice %2 {offsets = [22, 0], sizes = [80, 4], strides = [1, 1]} : vector<102x4xbf16> to vector<80x4xbf16>
    %12 = tpu.concatenate %3, %4, %5, %6, %7, %8, %9, %10, %11 in 1 : vector<80x4xbf16>, vector<80x4xbf16>, vector<80x4xbf16>, vector<80x4xbf16>, vector<80x4xbf16>, vector<80x4xbf16>, vector<80x4xbf16>, vector<80x4xbf16>, vector<80x4xbf16> -> vector<80x36xbf16>
    %c0_3 = arith.constant 0 : index
    %c0_4 = arith.constant 0 : index
    %13 = vector.load %arg2[%c0_3, %c0_4] : memref<36x8xbf16, #tpu.memory_space<vmem>>, vector<36x8xbf16>
    %cst_5 = arith.constant dense<0.000000e+00> : vector<80x8xf32>
    %14 = tpu.matmul %12, %13, %cst_5 {dimension_numbers = #tpu.dot_dimension_numbers<[1], [0], [0], [1], [0, 0, 1, 1], [], []>} : vector<80x36xbf16>, vector<36x8xbf16>, vector<80x8xf32> -> vector<80x8xf32>
    %c0_6 = arith.constant 0 : index
    %c0_7 = arith.constant 0 : index
    %15 = vector.load %arg3[%c0_6, %c0_7] : memref<1x8xf32, #tpu.memory_space<vmem>>, vector<1x8xf32>
    %16 = vector.broadcast %15 : vector<1x8xf32> to vector<80x8xf32>
    %17 = arith.addf %14, %16 : vector<80x8xf32>
    %cst_8 = arith.constant 0.000000e+00 : f32
    %18 = vector.broadcast %cst_8 : f32 to vector<80x8xf32>
    %19 = arith.maximumf %17, %18 : vector<80x8xf32>
    %20 = tpu.iota {dimensions = array<i32: 0>} : vector<80x1xi32>
    %c10_i32 = arith.constant 10 : i32
    %c0_i32 = arith.constant 0 : i32
    %21 = arith.cmpi eq, %c10_i32, %c0_i32 : i32
    %c1_i32 = arith.constant 1 : i32
    %22 = arith.select %21, %c1_i32, %c10_i32 : i32
    %23 = vector.broadcast %22 : i32 to vector<80x1xi32>
    %24 = arith.remsi %20, %23 : vector<80x1xi32>
    %c0_i32_9 = arith.constant 0 : i32
    %25 = vector.broadcast %c0_i32_9 : i32 to vector<80x1xi32>
    %26 = arith.cmpi ne, %24, %25 : vector<80x1xi32>
    %c0_i32_10 = arith.constant 0 : i32
    %27 = vector.broadcast %c0_i32_10 : i32 to vector<80x1xi32>
    %28 = arith.cmpi slt, %24, %27 : vector<80x1xi32>
    %c0_i32_11 = arith.constant 0 : i32
    %29 = arith.cmpi slt, %22, %c0_i32_11 : i32
    %30 = vector.broadcast %29 : i1 to vector<80x1xi1>
    %31 = vector.broadcast %30 : vector<80x1xi1> to vector<80x1xi1>
    %32 = arith.xori %28, %31 : vector<80x1xi1>
    %33 = arith.andi %32, %26 : vector<80x1xi1>
    %34 = vector.broadcast %22 : i32 to vector<80x1xi32>
    %35 = arith.addi %24, %34 : vector<80x1xi32>
    %36 = arith.select %33, %35, %24 : vector<80x1xi1>, vector<80x1xi32>
    %c8_i32 = arith.constant 8 : i32
    %37 = vector.broadcast %c8_i32 : i32 to vector<80x1xi32>
    %38 = arith.cmpi slt, %36, %37 : vector<80x1xi32>
    %cst_12 = arith.constant 0.000000e+00 : f32
    %39 = vector.shape_cast %38 : vector<80x1xi1> to vector<80x1xi1>
    %40 = vector.broadcast %39 : vector<80x1xi1> to vector<80x8xi1>
    %41 = vector.broadcast %cst_12 : f32 to vector<80x8xf32>
    %42 = arith.select %40, %19, %41 : vector<80x8xi1>, vector<80x8xf32>
    %43 = arith.truncf %42 : vector<80x8xf32> to vector<80x8xbf16>
    %c0_i32_13 = arith.constant 0 : i32
    %44 = arith.sitofp %c0_i32_13 : i32 to bf16
    %45 = vector.broadcast %44 : bf16 to vector<11x8xbf16>
    %46 = tpu.concatenate %45, %43 in 0 : vector<11x8xbf16>, vector<80x8xbf16> -> vector<91x8xbf16>
    %47 = vector.broadcast %44 : bf16 to vector<11x8xbf16>
    %48 = tpu.concatenate %46, %47 in 0 : vector<91x8xbf16>, vector<11x8xbf16> -> vector<102x8xbf16>
    %49 = vector.extract_strided_slice %48 {offsets = [0, 0], sizes = [80, 8], strides = [1, 1]} : vector<102x8xbf16> to vector<80x8xbf16>
    %50 = vector.extract_strided_slice %48 {offsets = [1, 0], sizes = [80, 8], strides = [1, 1]} : vector<102x8xbf16> to vector<80x8xbf16>
    %51 = vector.extract_strided_slice %48 {offsets = [2, 0], sizes = [80, 8], strides = [1, 1]} : vector<102x8xbf16> to vector<80x8xbf16>
    %52 = vector.extract_strided_slice %48 {offsets = [10, 0], sizes = [80, 8], strides = [1, 1]} : vector<102x8xbf16> to vector<80x8xbf16>
    %53 = vector.extract_strided_slice %48 {offsets = [11, 0], sizes = [80, 8], strides = [1, 1]} : vector<102x8xbf16> to vector<80x8xbf16>
    %54 = vector.extract_strided_slice %48 {offsets = [12, 0], sizes = [80, 8], strides = [1, 1]} : vector<102x8xbf16> to vector<80x8xbf16>
    %55 = vector.extract_strided_slice %48 {offsets = [20, 0], sizes = [80, 8], strides = [1, 1]} : vector<102x8xbf16> to vector<80x8xbf16>
    %56 = vector.extract_strided_slice %48 {offsets = [21, 0], sizes = [80, 8], strides = [1, 1]} : vector<102x8xbf16> to vector<80x8xbf16>
    %57 = vector.extract_strided_slice %48 {offsets = [22, 0], sizes = [80, 8], strides = [1, 1]} : vector<102x8xbf16> to vector<80x8xbf16>
    %58 = tpu.concatenate %49, %50, %51, %52, %53, %54, %55, %56, %57 in 1 : vector<80x8xbf16>, vector<80x8xbf16>, vector<80x8xbf16>, vector<80x8xbf16>, vector<80x8xbf16>, vector<80x8xbf16>, vector<80x8xbf16>, vector<80x8xbf16>, vector<80x8xbf16> -> vector<80x72xbf16>
    %c0_14 = arith.constant 0 : index
    %c0_15 = arith.constant 0 : index
    %59 = vector.load %arg4[%c0_14, %c0_15] : memref<72x8xbf16, #tpu.memory_space<vmem>>, vector<72x8xbf16>
    %cst_16 = arith.constant dense<0.000000e+00> : vector<80x8xf32>
    %60 = tpu.matmul %58, %59, %cst_16 {dimension_numbers = #tpu.dot_dimension_numbers<[1], [0], [0], [1], [0, 0, 1, 1], [], []>} : vector<80x72xbf16>, vector<72x8xbf16>, vector<80x8xf32> -> vector<80x8xf32>
    %c0_17 = arith.constant 0 : index
    %c0_18 = arith.constant 0 : index
    %61 = vector.load %arg5[%c0_17, %c0_18] : memref<1x8xf32, #tpu.memory_space<vmem>>, vector<1x8xf32>
    %62 = vector.broadcast %61 : vector<1x8xf32> to vector<80x8xf32>
    %63 = arith.addf %60, %62 : vector<80x8xf32>
    %cst_19 = arith.constant 0.000000e+00 : f32
    %64 = vector.broadcast %cst_19 : f32 to vector<80x8xf32>
    %65 = arith.maximumf %63, %64 : vector<80x8xf32>
    %c0_20 = arith.constant 0 : index
    %c0_21 = arith.constant 0 : index
    %c0_22 = arith.constant 0 : index
    %66 = vector.load %arg6[%c0_20, %c0_21, %c0_22] : memref<1x80x8xf32, #tpu.memory_space<vmem>>, vector<1x80x8xf32>
    %67 = vector.shape_cast %66 : vector<1x80x8xf32> to vector<80x8xf32>
    %68 = vector.shape_cast %65 : vector<80x8xf32> to vector<1x80x8xf32>
    tpu.vector_store %arg6[%c0_20, %c0_21, %c0_22], %68 {strides = array<i32>} : memref<1x80x8xf32, #tpu.memory_space<vmem>>, vector<1x80x8xf32>,
    return
  }
  func.func @transform_0(%arg0: i32) -> (i32, i32, i32, i32) {
    %c0_i32 = arith.constant 0 : i32
    %c0_i32_0 = arith.constant 0 : i32
    %c0_i32_1 = arith.constant 0 : i32
    %c0_i32_2 = arith.constant 0 : i32
    return %arg0, %c0_i32, %c0_i32_0, %c0_i32_1 : i32, i32, i32, i32
  }
  func.func @transform_1(%arg0: i32) -> (i32, i32) {
    %c0_i32 = arith.constant 0 : i32
    %c0_i32_0 = arith.constant 0 : i32
    %c0_i32_1 = arith.constant 0 : i32
    return %c0_i32, %c0_i32_0 : i32, i32
  }
  func.func @transform_2(%arg0: i32) -> (i32, i32) {
    %c0_i32 = arith.constant 0 : i32
    %c0_i32_0 = arith.constant 0 : i32
    %c0_i32_1 = arith.constant 0 : i32
    return %c0_i32, %c0_i32_0 : i32, i32
  }
  func.func @transform_3(%arg0: i32) -> (i32, i32) {
    %c0_i32 = arith.constant 0 : i32
    %c0_i32_0 = arith.constant 0 : i32
    %c0_i32_1 = arith.constant 0 : i32
    return %c0_i32, %c0_i32_0 : i32, i32
  }
  func.func @transform_4(%arg0: i32) -> (i32, i32) {
    %c0_i32 = arith.constant 0 : i32
    %c0_i32_0 = arith.constant 0 : i32
    %c0_i32_1 = arith.constant 0 : i32
    return %c0_i32, %c0_i32_0 : i32, i32
  }
  func.func @transform_5(%arg0: i32) -> (i32, i32, i32) {
    %c0_i32 = arith.constant 0 : i32
    %c0_i32_0 = arith.constant 0 : i32
    %c0_i32_1 = arith.constant 0 : i32
    return %arg0, %c0_i32, %c0_i32_0 : i32, i32, i32
  }
}

</mosaic_0001>

<llo_original>
// kernel: tpu_custom_call.1
$region0: #{tpu_custom_call.1}
  #allocation0 [shape = 'u32[]', space=smem, size = 0x4, offset = 0x4, fixed_abs, tag = 'smem constant byte address 0x4 - core index']
  #allocation1 [shape = 'u32[144,128]{1,0:T(1,128)}', space=vmem, size = 0x12000, scoped, tag = 'internal scratch']
  %s0 = inlined_call_operand.vmem [shape: bf16[2,4,102,4], index: 0, kind: input, shape index: {}]
  %s1 = inlined_call_operand.vmem [shape: bf16[36,8], index: 1, kind: input, shape index: {}]
  %s2 = inlined_call_operand.vmem [shape: f32[1,8], index: 2, kind: input, shape index: {}]
  %s3 = inlined_call_operand.vmem [shape: bf16[72,8], index: 3, kind: input, shape index: {}]
  %s4 = inlined_call_operand.vmem [shape: f32[1,8], index: 4, kind: input, shape index: {}]
  %s5 = inlined_call_operand.vmem [shape: f32[2,80,8], index: 5, kind: output, shape index: {}]
  %s6 = sld [smem:[#allocation0]]
  $region53: #{tpu_custom_call.1} parent=0
    _
  %s8 = ssub.s32 1, %s6
  %s9 = scalar_select 0, %s8, %s6
  loop: start=0, step=1, limit=4
  $region2: #{tpu_custom_call.1} parent=0 // loop_pre_header
    _
  $region3: #{tpu_custom_call.1} parent=0 // loop_header
    %s11 = sphi 0, %s15
    %p12 = scmp.ge.s32.totalorder %s11, 4
    %s21 = sphi 0, %s23
    %s24 = sphi 0, %s21
    %s25 = sphi 0, %s24
    %s41 = sphi 0, %s25
    %s45 = sphi 0, %s45
    %s47 = sphi 0, %s45
    %s48 = sphi 0, %s47
    %s62 = sphi 0, %s48
    %s66 = sphi 0, %s66
    %s68 = sphi 0, %s66
    %s69 = sphi 0, %s68
    %s83 = sphi 0, %s69
    %s87 = sphi 0, %s87
    %s89 = sphi 0, %s87
    %s90 = sphi 0, %s89
    %s104 = sphi 0, %s90
    %s108 = sphi 0, %s108
    %s110 = sphi 0, %s108
    %s111 = sphi 0, %s110
    %s125 = sphi 0, %s111
    %s131 = sphi 0, %s133
    %s134 = sphi 0, %s131
    %s135 = sphi 0, %s134
    %s151 = sphi 0, %s135
  $region4: #{tpu_custom_call.1} parent=0 // loop_header_branch
    %14 = sbr.rel (%p12) target = $region8
  $region5: #{tpu_custom_call.1} parent=0 // loop_body
    %s16 = ssub.s32 %s11, 1
    %s17 = ssub.s32 %s11, 2
    %s18 = sadd.s32 %s11, 1
    %s19 = ssub.s32 %s11, %s18
    %p20 = scmp.eq.s32.totalorder %s19, 0
    %s22 = sadd.s32 %s21, 1
    %s23 = scalar_select %p20, %s21, %s22
    %p26 = pneg %p20
    %p27 = scmp.eq.s32.totalorder %s11, 1
    %p28 = por %p26, %p27
    %p29 = scmp.ne.s32.totalorder %s21, %s24
    %p30 = scmp.eq.s32.totalorder %s11, 0
    %p31 = por %p29, %p30
    %p32 = scmp.ne.s32.totalorder %s21, %s24
    %p33 = scmp.eq.s32.totalorder %s16, 1
    %p34 = por %p32, %p33
    %p35 = scmp.ne.s32.totalorder %s24, %s25
    %p36 = scmp.eq.s32.totalorder %s16, 0
    %p37 = por %p35, %p36
    %p38 = scmp.ne.s32.totalorder %s24, %s25
    %p39 = scmp.eq.s32.totalorder %s17, 1
    %p40 = por %p38, %p39
    %p42 = scmp.ne.s32.totalorder %s25, %s41
    %p43 = scmp.eq.s32.totalorder %s17, 0
    %p44 = por %p42, %p43
    %s46 = sadd.s32 %s45, 1
    %p49 = scmp.eq.s32.totalorder %s11, 1
    %p50 = scmp.ne.s32.totalorder %s45, %s47
    %p51 = scmp.eq.s32.totalorder %s11, 0
    %p52 = por %p50, %p51
    %p53 = scmp.ne.s32.totalorder %s45, %s47
    %p54 = scmp.eq.s32.totalorder %s16, 1
    %p55 = por %p53, %p54
    %p56 = scmp.ne.s32.totalorder %s47, %s48
    %p57 = scmp.eq.s32.totalorder %s16, 0
    %p58 = por %p56, %p57
    %p59 = scmp.ne.s32.totalorder %s47, %s48
    %p60 = scmp.eq.s32.totalorder %s17, 1
    %p61 = por %p59, %p60
    %p63 = scmp.ne.s32.totalorder %s48, %s62
    %p64 = scmp.eq.s32.totalorder %s17, 0
    %p65 = por %p63, %p64
    %s67 = sadd.s32 %s66, 1
    %p70 = scmp.eq.s32.totalorder %s11, 1
    %p71 = scmp.ne.s32.totalorder %s66, %s68
    %p72 = scmp.eq.s32.totalorder %s11, 0
    %p73 = por %p71, %p72
    %p74 = scmp.ne.s32.totalorder %s66, %s68
    %p75 = scmp.eq.s32.totalorder %s16, 1
    %p76 = por %p74, %p75
    %p77 = scmp.ne.s32.totalorder %s68, %s69
    %p78 = scmp.eq.s32.totalorder %s16, 0
    %p79 = por %p77, %p78
    %p80 = scmp.ne.s32.totalorder %s68, %s69
    %p81 = scmp.eq.s32.totalorder %s17, 1
    %p82 = por %p80, %p81
    %p84 = scmp.ne.s32.totalorder %s69, %s83
    %p85 = scmp.eq.s32.totalorder %s17, 0
    %p86 = por %p84, %p85
    %s88 = sadd.s32 %s87, 1
    %p91 = scmp.eq.s32.totalorder %s11, 1
    %p92 = scmp.ne.s32.totalorder %s87, %s89
    %p93 = scmp.eq.s32.totalorder %s11, 0
    %p94 = por %p92, %p93
    %p95 = scmp.ne.s32.totalorder %s87, %s89
    %p96 = scmp.eq.s32.totalorder %s16, 1
    %p97 = por %p95, %p96
    %p98 = scmp.ne.s32.totalorder %s89, %s90
    %p99 = scmp.eq.s32.totalorder %s16, 0
    %p100 = por %p98, %p99
    %p101 = scmp.ne.s32.totalorder %s89, %s90
    %p102 = scmp.eq.s32.totalorder %s17, 1
    %p103 = por %p101, %p102
    %p105 = scmp.ne.s32.totalorder %s90, %s104
    %p106 = scmp.eq.s32.totalorder %s17, 0
    %p107 = por %p105, %p106
    %s109 = sadd.s32 %s108, 1
    %p112 = scmp.eq.s32.totalorder %s11, 1
    %p113 = scmp.ne.s32.totalorder %s108, %s110
    %p114 = scmp.eq.s32.totalorder %s11, 0
    %p115 = por %p113, %p114
    %p116 = scmp.ne.s32.totalorder %s108, %s110
    %p117 = scmp.eq.s32.totalorder %s16, 1
    %p118 = por %p116, %p117
    %p119 = scmp.ne.s32.totalorder %s110, %s111
    %p120 = scmp.eq.s32.totalorder %s16, 0
    %p121 = por %p119, %p120
    %p122 = scmp.ne.s32.totalorder %s110, %s111
    %p123 = scmp.eq.s32.totalorder %s17, 1
    %p124 = por %p122, %p123
    %p126 = scmp.ne.s32.totalorder %s111, %s125
    %p127 = scmp.eq.s32.totalorder %s17, 0
    %p128 = por %p126, %p127
    %s129 = ssub.s32 %s11, %s18
    %p130 = scmp.eq.s32.totalorder %s129, 0
    %s132 = sadd.s32 %s131, 1
    %s133 = scalar_select %p130, %s131, %s132
    %p136 = pneg %p130
    %p137 = scmp.eq.s32.totalorder %s11, 1
    %p138 = por %p136, %p137
    %p139 = scmp.ne.s32.totalorder %s131, %s134
    %p140 = scmp.eq.s32.totalorder %s11, 0
    %p141 = por %p139, %p140
    %p142 = scmp.ne.s32.totalorder %s131, %s134
    %p143 = scmp.eq.s32.totalorder %s16, 1
    %p144 = por %p142, %p143
    %p145 = scmp.ne.s32.totalorder %s134, %s135
    %p146 = scmp.eq.s32.totalorder %s16, 0
    %p147 = por %p145, %p146
    %p148 = scmp.ne.s32.totalorder %s134, %s135
    %p149 = scmp.eq.s32.totalorder %s17, 1
    %p150 = por %p148, %p149
    %p152 = scmp.ne.s32.totalorder %s135, %s151
    %p153 = scmp.eq.s32.totalorder %s17, 0
    %p154 = por %p152, %p153
    %p155 = scmp.le.s32.totalorder 1, %s11
    %p156 = scmp.lt.s32.totalorder %s11, 3
    %p157 = pnand %p155, %p156
    %p158 = pneg %p157
    // Predicated region
    $region9: #{tpu_custom_call.1} parent=5 // pred_check
      _
    $region10: #{tpu_custom_call.1} parent=5 // pred_check_branch
      %160 = sbr.rel (%p157) target = $region12
    $region11: #{tpu_custom_call.1} parent=5 // pred_region
      %s161 = ssub.s32 %s11, 1
      // Predicated region
      $region13: #{tpu_custom_call.1} parent=11 // pred_check
        %p162 = pneg %p58
      $region14: #{tpu_custom_call.1} parent=11 // pred_check_branch
        %164 = sbr.rel (%p162) target = $region16
      $region15: #{tpu_custom_call.1} parent=11 // pred_region
        _
      $region16: #{tpu_custom_call.1} parent=11 // pred_fallthru
        _
      // Predicated region
      $region17: #{tpu_custom_call.1} parent=11 // pred_check
        %p165 = pneg %p79
      $region18: #{tpu_custom_call.1} parent=11 // pred_check_branch
        %167 = sbr.rel (%p165) target = $region20
      $region19: #{tpu_custom_call.1} parent=11 // pred_region
        _
      $region20: #{tpu_custom_call.1} parent=11 // pred_fallthru
        _
      // Predicated region
      $region21: #{tpu_custom_call.1} parent=11 // pred_check
        %p168 = pneg %p100
      $region22: #{tpu_custom_call.1} parent=11 // pred_check_branch
        %170 = sbr.rel (%p168) target = $region24
      $region23: #{tpu_custom_call.1} parent=11 // pred_region
        _
      $region24: #{tpu_custom_call.1} parent=11 // pred_fallthru
        _
      // Predicated region
      $region25: #{tpu_custom_call.1} parent=11 // pred_check
        %p171 = pneg %p121
      $region26: #{tpu_custom_call.1} parent=11 // pred_check_branch
        %173 = sbr.rel (%p171) target = $region28
      $region27: #{tpu_custom_call.1} parent=11 // pred_region
        _
      $region28: #{tpu_custom_call.1} parent=11 // pred_fallthru
        _
    $region12: #{tpu_custom_call.1} parent=5 // pred_fallthru
      _
    %p174 = scmp.lt.s32.totalorder %s11, 2
    // Predicated region
    $region29: #{tpu_custom_call.1} parent=5 // pred_check
      %p175 = pneg %p174
    $region30: #{tpu_custom_call.1} parent=5 // pred_check_branch
      %177 = sbr.rel (%p175) target = $region32
    $region31: #{tpu_custom_call.1} parent=5 // pred_region
      // Predicated region
      $region33: #{tpu_custom_call.1} parent=31 // pred_check
        %p178 = pneg %p31
      $region34: #{tpu_custom_call.1} parent=31 // pred_check_branch
        %180 = sbr.rel (%p178) target = $region36
      $region35: #{tpu_custom_call.1} parent=31 // pred_region
        %p181 = scmp.lt.s32.totalorder %s11, 1
        %s182 = scalar_select %p181, %s11, 1
        %s183 = smul.addr %s182, 52
        %s184 = smul.addr %s183, 4
        %s185 = scalar_lea.vmem %s0, %s184
      $region36: #{tpu_custom_call.1} parent=31 // pred_fallthru
        _
    $region32: #{tpu_custom_call.1} parent=5 // pred_fallthru
      _
    %p186 = scmp.le.s32.totalorder 1, %s11
    %p187 = scmp.lt.s32.totalorder %s11, 3
    %p188 = pnand %p186, %p187
    %p189 = pneg %p188
    // Predicated region
    $region37: #{tpu_custom_call.1} parent=5 // pred_check
      _
    $region38: #{tpu_custom_call.1} parent=5 // pred_check_branch
      %191 = sbr.rel (%p188) target = $region40
    $region39: #{tpu_custom_call.1} parent=5 // pred_region
      %s192 = ssub.s32 %s11, 1
      %p193 = scmp.lt.s32.totalorder %s16, 1
      %s194 = scalar_select %p193, %s16, 1
      %s195 = smul.addr %s194, 52
      %s196 = smul.addr %s195, 4
      %s197 = scalar_lea.vmem %s0, %s196
      %p198 = pneg %p37
      %p199 = pneg %p34
      %p200 = pneg %p58
      %p201 = pneg %p55
      %p202 = pneg %p79
      %p203 = pneg %p76
      %p204 = pneg %p100
      %p205 = pneg %p97
      %p206 = pneg %p121
      %p207 = pneg %p118
      %p208 = pneg %p147
      %p209 = pneg %p144
      %p210 = scmp.lt.s32.totalorder %s16, 1
      %s211 = scalar_select %p210, %s16, 1
      %s212 = smul.addr %s211, 10
      %s213 = smul.addr %s212, 8
      %s214 = scalar_lea.vmem %s5, %s213
      %p215 = scmp.lt.s32.totalorder %s16, 1
      %s216 = scalar_select %p215, %s16, 1
      %s217 = smul.addr %s216, 52
      %s218 = smul.addr %s217, 4
      %s219 = scalar_lea.vmem %s0, %s218
      %p220 = scmp.lt.s32.totalorder %s16, 1
      %s221 = scalar_select %p220, %s16, 1
      %s222 = smul.addr %s221, 10
      %s223 = smul.addr %s222, 8
      %s224 = scalar_lea.vmem %s5, %s223
      %v227 = vld [vmem:[%s219] sm:$0xf]
      %v228 = vld [vmem:[%s219 + $0x4] sm:$0xf]
      %v229 = vld [vmem:[%s219 + $0x8] sm:$0xf]
      %v230 = vld [vmem:[%s219 + $0xc] sm:$0xf]
      %v231 = vld [vmem:[%s219 + $0x10] sm:$0xf]
      %v232 = vld [vmem:[%s219 + $0x14] sm:$0xf]
      %v233 = vld [vmem:[%s219 + $0x18] sm:$0xf]
      %v234 = vld [vmem:[%s219 + $0x1c] sm:$0xf]
      %v235 = vld [vmem:[%s219 + $0x20] sm:$0xf]
      %v236 = vld [vmem:[%s219 + $0x24] sm:$0xf]
      %v237 = vld [vmem:[%s219 + $0x28] sm:$0xf]
      %v238 = vld [vmem:[%s219 + $0x2c] sm:$0xf]
      %v239 = vld [vmem:[%s219 + $0x30] sm:$0x7]
      %v240 = vld [vmem:[%s219 + $0x34] sm:$0xf]
      %v241 = vld [vmem:[%s219 + $0x38] sm:$0xf]
      %v242 = vld [vmem:[%s219 + $0x3c] sm:$0xf]
      %v243 = vld [vmem:[%s219 + $0x40] sm:$0xf]
      %v244 = vld [vmem:[%s219 + $0x44] sm:$0xf]
      %v245 = vld [vmem:[%s219 + $0x48] sm:$0xf]
      %v246 = vld [vmem:[%s219 + $0x4c] sm:$0xf]
      %v247 = vld [vmem:[%s219 + $0x50] sm:$0xf]
      %v248 = vld [vmem:[%s219 + $0x54] sm:$0xf]
      %v249 = vld [vmem:[%s219 + $0x58] sm:$0xf]
      %v250 = vld [vmem:[%s219 + $0x5c] sm:$0xf]
      %v251 = vld [vmem:[%s219 + $0x60] sm:$0xf]
      %v252 = vld [vmem:[%s219 + $0x64] sm:$0x7]
      %v253 = vld [vmem:[%s219 + $0x68] sm:$0xf]
      %v254 = vld [vmem:[%s219 + $0x6c] sm:$0xf]
      %v255 = vld [vmem:[%s219 + $0x70] sm:$0xf]
      %v256 = vld [vmem:[%s219 + $0x74] sm:$0xf]
      %v257 = vld [vmem:[%s219 + $0x78] sm:$0xf]
      %v258 = vld [vmem:[%s219 + $0x7c] sm:$0xf]
      %v259 = vld [vmem:[%s219 + $0x80] sm:$0xf]
      %v260 = vld [vmem:[%s219 + $0x84] sm:$0xf]
      %v261 = vld [vmem:[%s219 + $0x88] sm:$0xf]
      %v262 = vld [vmem:[%s219 + $0x8c] sm:$0xf]
      %v263 = vld [vmem:[%s219 + $0x90] sm:$0xf]
      %v264 = vld [vmem:[%s219 + $0x94] sm:$0xf]
      %v265 = vld [vmem:[%s219 + $0x98] sm:$0x7]
      %v266 = vld [vmem:[%s219 + $0x9c] sm:$0xf]
      %v267 = vld [vmem:[%s219 + $0xa0] sm:$0xf]
      %v268 = vld [vmem:[%s219 + $0xa4] sm:$0xf]
      %v269 = vld [vmem:[%s219 + $0xa8] sm:$0xf]
      %v270 = vld [vmem:[%s219 + $0xac] sm:$0xf]
      %v271 = vld [vmem:[%s219 + $0xb0] sm:$0xf]
      %v272 = vld [vmem:[%s219 + $0xb4] sm:$0xf]
      %v273 = vld [vmem:[%s219 + $0xb8] sm:$0xf]
      %v274 = vld [vmem:[%s219 + $0xbc] sm:$0xf]
      %v275 = vld [vmem:[%s219 + $0xc0] sm:$0xf]
      %v276 = vld [vmem:[%s219 + $0xc4] sm:$0xf]
      %v277 = vld [vmem:[%s219 + $0xc8] sm:$0xf]
      %v278 = vld [vmem:[%s219 + $0xcc] sm:$0x7]
      %vm279 = vcmask 27648
      %v282 = vsel %vm279, %v227, 4286644096
      %v285 = vsel %vm279, %v240, 4286644096
      %v287 = vmax.bf16 %v282, %v285
      %v289 = vsel %vm279, %v253, 4286644096
      %v291 = vmax.bf16 %v287, %v289
      %v293 = vsel %vm279, %v266, 4286644096
      %v295 = vmax.bf16 %v291, %v293
      %v297 = vsel %vm279, %v228, 4286644096
      %v300 = vsel %vm279, %v241, 4286644096
      %v302 = vmax.bf16 %v297, %v300
      %v304 = vsel %vm279, %v254, 4286644096
      %v306 = vmax.bf16 %v302, %v304
      %v308 = vsel %vm279, %v267, 4286644096
      %v310 = vmax.bf16 %v306, %v308
      %v312 = vsel %vm279, %v229, 4286644096
      %v315 = vsel %vm279, %v242, 4286644096
      %v317 = vmax.bf16 %v312, %v315
      %v319 = vsel %vm279, %v255, 4286644096
      %v321 = vmax.bf16 %v317, %v319
      %v323 = vsel %vm279, %v268, 4286644096
      %v325 = vmax.bf16 %v321, %v323
      %v327 = vsel %vm279, %v230, 4286644096
      %v330 = vsel %vm279, %v243, 4286644096
      %v332 = vmax.bf16 %v327, %v330
      %v334 = vsel %vm279, %v256, 4286644096
      %v336 = vmax.bf16 %v332, %v334
      %v338 = vsel %vm279, %v269, 4286644096
      %v340 = vmax.bf16 %v336, %v338
      %v342 = vsel %vm279, %v231, 4286644096
      %v345 = vsel %vm279, %v244, 4286644096
      %v347 = vmax.bf16 %v342, %v345
      %v349 = vsel %vm279, %v257, 4286644096
      %v351 = vmax.bf16 %v347, %v349
      %v353 = vsel %vm279, %v270, 4286644096
      %v355 = vmax.bf16 %v351, %v353
      %v357 = vsel %vm279, %v232, 4286644096
      %v360 = vsel %vm279, %v245, 4286644096
      %v362 = vmax.bf16 %v357, %v360
      %v364 = vsel %vm279, %v258, 4286644096
      %v366 = vmax.bf16 %v362, %v364
      %v368 = vsel %vm279, %v271, 4286644096
      %v370 = vmax.bf16 %v366, %v368
      %v372 = vsel %vm279, %v233, 4286644096
      %v375 = vsel %vm279, %v246, 4286644096
      %v377 = vmax.bf16 %v372, %v375
      %v379 = vsel %vm279, %v259, 4286644096
      %v381 = vmax.bf16 %v377, %v379
      %v383 = vsel %vm279, %v272, 4286644096
      %v385 = vmax.bf16 %v381, %v383
      %v387 = vsel %vm279, %v234, 4286644096
      %v390 = vsel %vm279, %v247, 4286644096
      %v392 = vmax.bf16 %v387, %v390
      %v394 = vsel %vm279, %v260, 4286644096
      %v396 = vmax.bf16 %v392, %v394
      %v398 = vsel %vm279, %v273, 4286644096
      %v400 = vmax.bf16 %v396, %v398
      %v402 = vsel %vm279, %v235, 4286644096
      %v405 = vsel %vm279, %v248, 4286644096
      %v407 = vmax.bf16 %v402, %v405
      %v409 = vsel %vm279, %v261, 4286644096
      %v411 = vmax.bf16 %v407, %v409
      %v413 = vsel %vm279, %v274, 4286644096
      %v415 = vmax.bf16 %v411, %v413
      %v417 = vsel %vm279, %v236, 4286644096
      %v420 = vsel %vm279, %v249, 4286644096
      %v422 = vmax.bf16 %v417, %v420
      %v424 = vsel %vm279, %v262, 4286644096
      %v426 = vmax.bf16 %v422, %v424
      %v428 = vsel %vm279, %v275, 4286644096
      %v430 = vmax.bf16 %v426, %v428
      %v432 = vsel %vm279, %v237, 4286644096
      %v435 = vsel %vm279, %v250, 4286644096
      %v437 = vmax.bf16 %v432, %v435
      %v439 = vsel %vm279, %v263, 4286644096
      %v441 = vmax.bf16 %v437, %v439
      %v443 = vsel %vm279, %v276, 4286644096
      %v445 = vmax.bf16 %v441, %v443
      %v447 = vsel %vm279, %v238, 4286644096
      %v450 = vsel %vm279, %v251, 4286644096
      %v452 = vmax.bf16 %v447, %v450
      %v454 = vsel %vm279, %v264, 4286644096
      %v456 = vmax.bf16 %v452, %v454
      %v458 = vsel %vm279, %v277, 4286644096
      %v460 = vmax.bf16 %v456, %v458
      %vm461 = vcmask 26624
      %v463 = vsel %vm461, %v239, 4286644096
      %v466 = vsel %vm461, %v252, 4286644096
      %v468 = vmax.bf16 %v463, %v466
      %v470 = vsel %vm461, %v265, 4286644096
      %v472 = vmax.bf16 %v468, %v470
      %v474 = vsel %vm461, %v278, 4286644096
      %v476 = vmax.bf16 %v472, %v474
      %v487 = vunpack.c.l.b16 %v295
      %v488 = vunpack.c.l.b16 %v310
      %v489 = vunpack.c.l.b16 %v325
      %v490 = vunpack.c.l.b16 %v340
      %v491 = vunpack.c.l.b16 %v355
      %v492 = vunpack.c.l.b16 %v370
      %v493 = vunpack.c.l.b16 %v385
      %v494 = vunpack.c.l.b16 %v400
      %v495 = vunpack.c.l.b16 %v415
      %v496 = vunpack.c.l.b16 %v430
      %v497 = vpack.c.b16 %v488, %v487
      %v498 = vpack.c.b16 %v490, %v489
      %v499 = vpack.c.b16 %v492, %v491
      %v500 = vpack.c.b16 %v494, %v493
      %v501 = vpack.c.b16 %v496, %v495
      %v503 = vunpack.c.l.b16 %v445
      %v504 = vpack.c.b16 %v503, %v503
      %vm505 = vsmask.f32 7424
      %v507 = vshrl.u32 %v497, 16
      %v509 = vshll.u32 %v497, 16
      %v511 = vrot.slane %v509, 1
      %v512 = vor.u32 %v507, %v511
      %v514 = vshll.u32 %v498, 16
      %v516 = vrot.slane %v514, 1
      %v517 = vsel %vm505, %v512, %v516
      %v518 = vshrl.u32 %v498, 16
      %v520 = vor.u32 %v518, %v516
      %v522 = vshll.u32 %v499, 16
      %v524 = vrot.slane %v522, 1
      %v525 = vsel %vm505, %v520, %v524
      %v526 = vshrl.u32 %v499, 16
      %v528 = vor.u32 %v526, %v524
      %v530 = vshll.u32 %v500, 16
      %v532 = vrot.slane %v530, 1
      %v533 = vsel %vm505, %v528, %v532
      %v534 = vshrl.u32 %v500, 16
      %v536 = vor.u32 %v534, %v532
      %v538 = vshll.u32 %v501, 16
      %v540 = vrot.slane %v538, 1
      %v541 = vsel %vm505, %v536, %v540
      %v542 = vshrl.u32 %v501, 16
      %v544 = vor.u32 %v542, %v540
      %v546 = vshll.u32 %v504, 16
      %v548 = vrot.slane %v546, 1
      %v549 = vsel %vm505, %v544, %v548
      %550 = vrot.lane.b32.xlu0 %v517, 4
      %v551 = vpop.permute.xlu0 %550
      %552 = vrot.lane.b32.xlu0 %v525, 4
      %v553 = vpop.permute.xlu0 %552
      %554 = vrot.lane.b32.xlu0 %v533, 4
      %v555 = vpop.permute.xlu0 %554
      %556 = vrot.lane.b32.xlu0 %v541, 4
      %v557 = vpop.permute.xlu0 %556
      %558 = vrot.lane.b32.xlu0 %v549, 4
      %v559 = vpop.permute.xlu0 %558
      %vm560 = vcmask 1046528
      %v561 = vrot.slane %v497, 1
      %v562 = vrot.slane %v498, 1
      %v563 = vsel %vm560, %v561, %v562
      %v564 = vrot.slane %v499, 1
      %v565 = vsel %vm560, %v562, %v564
      %v566 = vrot.slane %v500, 1
      %v567 = vsel %vm560, %v564, %v566
      %v568 = vrot.slane %v501, 1
      %v569 = vsel %vm560, %v566, %v568
      %v570 = vrot.slane %v504, 1
      %v571 = vsel %vm560, %v568, %v570
      %572 = vrot.lane.b32.xlu0 %v563, 8
      %v573 = vpop.permute.xlu0 %572
      %574 = vrot.lane.b32.xlu0 %v565, 8
      %v575 = vpop.permute.xlu0 %574
      %576 = vrot.lane.b32.xlu0 %v567, 8
      %v577 = vpop.permute.xlu0 %576
      %578 = vrot.lane.b32.xlu0 %v569, 8
      %v579 = vpop.permute.xlu0 %578
      %580 = vrot.lane.b32.xlu0 %v571, 8
      %v581 = vpop.permute.xlu0 %580
      %v583 = vunpack.c.l.b16 %v460
      %v584 = vpack.c.b16 %v489, %v488
      %v585 = vpack.c.b16 %v491, %v490
      %v586 = vpack.c.b16 %v493, %v492
      %v587 = vpack.c.b16 %v495, %v494
      %v588 = vpack.c.b16 %v503, %v496
      %v589 = vpack.c.b16 %v583, %v583
      %v590 = vrot.slane %v584, 1
      %v591 = vrot.slane %v585, 1
      %v592 = vsel %vm560, %v590, %v591
      %v593 = vrot.slane %v586, 1
      %v594 = vsel %vm560, %v591, %v593
      %v595 = vrot.slane %v587, 1
      %v596 = vsel %vm560, %v593, %v595
      %v597 = vrot.slane %v588, 1
      %v598 = vsel %vm560, %v595, %v597
      %v599 = vrot.slane %v589, 1
      %v600 = vsel %vm560, %v597, %v599
      %601 = vrot.lane.b32.xlu0 %v592, 12
      %v602 = vpop.permute.xlu0 %601
      %603 = vrot.lane.b32.xlu0 %v594, 12
      %v604 = vpop.permute.xlu0 %603
      %605 = vrot.lane.b32.xlu0 %v596, 12
      %v606 = vpop.permute.xlu0 %605
      %607 = vrot.lane.b32.xlu0 %v598, 12
      %v608 = vpop.permute.xlu0 %607
      %609 = vrot.lane.b32.xlu0 %v600, 12
      %v610 = vpop.permute.xlu0 %609
      %vm611 = vsmask.f32 6400
      %v613 = vshrl.u32 %v584, 16
      %v615 = vrot.slane %v613, 1
      %v616 = vshll.u32 %v584, 16
      %v618 = vrot.slane %v616, 2
      %v619 = vor.u32 %v615, %v618
      %v621 = vshrl.u32 %v585, 16
      %v623 = vrot.slane %v621, 1
      %v624 = vshll.u32 %v585, 16
      %v626 = vrot.slane %v624, 2
      %v627 = vor.u32 %v623, %v626
      %v628 = vsel %vm611, %v619, %v627
      %v630 = vshrl.u32 %v586, 16
      %v632 = vrot.slane %v630, 1
      %v633 = vshll.u32 %v586, 16
      %v635 = vrot.slane %v633, 2
      %v636 = vor.u32 %v632, %v635
      %v637 = vsel %vm611, %v627, %v636
      %v639 = vshrl.u32 %v587, 16
      %v641 = vrot.slane %v639, 1
      %v642 = vshll.u32 %v587, 16
      %v644 = vrot.slane %v642, 2
      %v645 = vor.u32 %v641, %v644
      %v646 = vsel %vm611, %v636, %v645
      %v648 = vshrl.u32 %v588, 16
      %v650 = vrot.slane %v648, 1
      %v651 = vshll.u32 %v588, 16
      %v653 = vrot.slane %v651, 2
      %v654 = vor.u32 %v650, %v653
      %v655 = vsel %vm611, %v645, %v654
      %v657 = vshrl.u32 %v589, 16
      %v659 = vrot.slane %v657, 1
      %v660 = vshll.u32 %v589, 16
      %v662 = vrot.slane %v660, 2
      %v663 = vor.u32 %v659, %v662
      %v664 = vsel %vm611, %v654, %v663
      %665 = vrot.lane.b32.xlu0 %v628, 16
      %v666 = vpop.permute.xlu0 %665
      %667 = vrot.lane.b32.xlu0 %v637, 16
      %v668 = vpop.permute.xlu0 %667
      %669 = vrot.lane.b32.xlu0 %v646, 16
      %v670 = vpop.permute.xlu0 %669
      %671 = vrot.lane.b32.xlu0 %v655, 16
      %v672 = vpop.permute.xlu0 %671
      %673 = vrot.lane.b32.xlu0 %v664, 16
      %v674 = vpop.permute.xlu0 %673
      %vm675 = vcmask 1045504
      %v676 = vrot.slane %v584, 2
      %v677 = vrot.slane %v585, 2
      %v678 = vsel %vm675, %v676, %v677
      %v679 = vrot.slane %v586, 2
      %v680 = vsel %vm675, %v677, %v679
      %v681 = vrot.slane %v587, 2
      %v682 = vsel %vm675, %v679, %v681
      %v683 = vrot.slane %v588, 2
      %v684 = vsel %vm675, %v681, %v683
      %v685 = vrot.slane %v589, 2
      %v686 = vsel %vm675, %v683, %v685
      %687 = vrot.lane.b32.xlu0 %v678, 20
      %v688 = vpop.permute.xlu0 %687
      %689 = vrot.lane.b32.xlu0 %v680, 20
      %v690 = vpop.permute.xlu0 %689
      %691 = vrot.lane.b32.xlu0 %v682, 20
      %v692 = vpop.permute.xlu0 %691
      %693 = vrot.lane.b32.xlu0 %v684, 20
      %v694 = vpop.permute.xlu0 %693
      %695 = vrot.lane.b32.xlu0 %v686, 20
      %v696 = vpop.permute.xlu0 %695
      %v698 = vunpack.c.l.b16 %v476
      %v699 = vpack.c.b16 %v583, %v503
      %v700 = vpack.c.b16 %v698, %v698
      %v701 = vrot.slane %v498, 2
      %v702 = vrot.slane %v499, 2
      %v703 = vsel %vm675, %v701, %v702
      %v704 = vrot.slane %v500, 2
      %v705 = vsel %vm675, %v702, %v704
      %v706 = vrot.slane %v501, 2
      %v707 = vsel %vm675, %v704, %v706
      %v708 = vrot.slane %v699, 2
      %v709 = vsel %vm675, %v706, %v708
      %v710 = vrot.slane %v700, 2
      %v711 = vsel %vm675, %v708, %v710
      %712 = vrot.lane.b32.xlu0 %v703, 24
      %v713 = vpop.permute.xlu0 %712
      %714 = vrot.lane.b32.xlu0 %v705, 24
      %v715 = vpop.permute.xlu0 %714
      %716 = vrot.lane.b32.xlu0 %v707, 24
      %v717 = vpop.permute.xlu0 %716
      %718 = vrot.lane.b32.xlu0 %v709, 24
      %v719 = vpop.permute.xlu0 %718
      %720 = vrot.lane.b32.xlu0 %v711, 24
      %v721 = vpop.permute.xlu0 %720
      %vm722 = vsmask.f32 5376
      %v723 = vrot.slane %v518, 2
      %v724 = vrot.slane %v514, 3
      %v725 = vor.u32 %v723, %v724
      %v726 = vrot.slane %v526, 2
      %v727 = vrot.slane %v522, 3
      %v728 = vor.u32 %v726, %v727
      %v729 = vsel %vm722, %v725, %v728
      %v730 = vrot.slane %v534, 2
      %v731 = vrot.slane %v530, 3
      %v732 = vor.u32 %v730, %v731
      %v733 = vsel %vm722, %v728, %v732
      %v734 = vrot.slane %v542, 2
      %v735 = vrot.slane %v538, 3
      %v736 = vor.u32 %v734, %v735
      %v737 = vsel %vm722, %v732, %v736
      %v739 = vshrl.u32 %v699, 16
      %v741 = vrot.slane %v739, 2
      %v742 = vshll.u32 %v699, 16
      %v744 = vrot.slane %v742, 3
      %v745 = vor.u32 %v741, %v744
      %v746 = vsel %vm722, %v736, %v745
      %v748 = vshrl.u32 %v700, 16
      %v750 = vrot.slane %v748, 2
      %v751 = vshll.u32 %v700, 16
      %v753 = vrot.slane %v751, 3
      %v754 = vor.u32 %v750, %v753
      %v755 = vsel %vm722, %v745, %v754
      %756 = vrot.lane.b32.xlu0 %v729, 28
      %v757 = vpop.permute.xlu0 %756
      %758 = vrot.lane.b32.xlu0 %v733, 28
      %v759 = vpop.permute.xlu0 %758
      %760 = vrot.lane.b32.xlu0 %v737, 28
      %v761 = vpop.permute.xlu0 %760
      %762 = vrot.lane.b32.xlu0 %v746, 28
      %v763 = vpop.permute.xlu0 %762
      %764 = vrot.lane.b32.xlu0 %v755, 28
      %v765 = vpop.permute.xlu0 %764
      %vm766 = vcmask 1044480
      %v767 = vrot.slane %v498, 3
      %v768 = vrot.slane %v499, 3
      %v769 = vsel %vm766, %v767, %v768
      %v770 = vrot.slane %v500, 3
      %v771 = vsel %vm766, %v768, %v770
      %v772 = vrot.slane %v501, 3
      %v773 = vsel %vm766, %v770, %v772
      %v774 = vrot.slane %v699, 3
      %v775 = vsel %vm766, %v772, %v774
      %v776 = vrot.slane %v700, 3
      %v777 = vsel %vm766, %v774, %v776
      %778 = vrot.lane.b32.xlu0 %v769, 32
      %v779 = vpop.permute.xlu0 %778
      %780 = vrot.lane.b32.xlu0 %v771, 32
      %v781 = vpop.permute.xlu0 %780
      %782 = vrot.lane.b32.xlu0 %v773, 32
      %v783 = vpop.permute.xlu0 %782
      %784 = vrot.lane.b32.xlu0 %v775, 32
      %v785 = vpop.permute.xlu0 %784
      %786 = vrot.lane.b32.xlu0 %v777, 32
      %v787 = vpop.permute.xlu0 %786
      %vm788 = vcmask 31744
      %v790 = vsel %vm788, %v497, %v551
      %v792 = vsel %vm788, %v498, %v553
      %v794 = vsel %vm788, %v499, %v555
      %v796 = vsel %vm788, %v500, %v557
      %v798 = vsel %vm788, %v501, %v559
      %vm799 = vcmask 64512
      %v801 = vsel %vm799, %v790, %v573
      %v803 = vsel %vm799, %v792, %v575
      %v805 = vsel %vm799, %v794, %v577
      %v807 = vsel %vm799, %v796, %v579
      %v809 = vsel %vm799, %v798, %v581
      %vm810 = vcmask 97280
      %v812 = vsel %vm810, %v801, %v602
      %v814 = vsel %vm810, %v803, %v604
      %v816 = vsel %vm810, %v805, %v606
      %v818 = vsel %vm810, %v807, %v608
      %v820 = vsel %vm810, %v809, %v610
      %vm821 = vcmask 130048
      %v823 = vsel %vm821, %v812, %v666
      %v825 = vsel %vm821, %v814, %v668
      %v827 = vsel %vm821, %v816, %v670
      %v829 = vsel %vm821, %v818, %v672
      %v831 = vsel %vm821, %v820, %v674
      %vm832 = vcmask 162816
      %v834 = vsel %vm832, %v823, %v688
      %v836 = vsel %vm832, %v825, %v690
      %v838 = vsel %vm832, %v827, %v692
      %v840 = vsel %vm832, %v829, %v694
      %v842 = vsel %vm832, %v831, %v696
      %vm843 = vcmask 195584
      %v845 = vsel %vm843, %v834, %v713
      %v847 = vsel %vm843, %v836, %v715
      %v849 = vsel %vm843, %v838, %v717
      %v851 = vsel %vm843, %v840, %v719
      %v853 = vsel %vm843, %v842, %v721
      %vm854 = vcmask 228352
      %v856 = vsel %vm854, %v845, %v757
      %v858 = vsel %vm854, %v847, %v759
      %v860 = vsel %vm854, %v849, %v761
      %v862 = vsel %vm854, %v851, %v763
      %v864 = vsel %vm854, %v853, %v765
      %vm865 = vcmask 261120
      %v867 = vsel %vm865, %v856, %v779
      %v869 = vsel %vm865, %v858, %v781
      %v871 = vsel %vm865, %v860, %v783
      %v873 = vsel %vm865, %v862, %v785
      %v875 = vsel %vm865, %v864, %v787
      %v876 = vld [vmem:[%s1] sm:$0xf]
      %v877 = vld [vmem:[%s1 + $0x4] sm:$0xf]
      %v878 = vld [vmem:[%s1 + $0x8] sm:$0xf]
      %v879 = vld [vmem:[%s1 + $0xc] sm:$0xf]
      %v880 = vld [vmem:[%s1 + $0x10] sm:$0x3]
      %v881 = vld [vmem:[%s2] sm:$0x1]
      %v883 = vlaneseq
      %v884 = vshrl.u32 %v883, 7
      %v885 = vsub.s32 0, %v884
      %v886 = vrot.slane %v881, %v885
      %v893 = vunpack.c.l.b16 %v876
      %v894 = vunpack.c.l.b16 %v877
      %v895 = vunpack.c.l.b16 %v878
      %v896 = vunpack.c.l.b16 %v879
      %v897 = vunpack.c.l.b16 %v880
      %v898 = vpack.c.b16 %v894, %v893
      %v899 = vpack.c.b16 %v896, %v895
      %v900 = vpack.c.b16 %v897, %v897
      %vm903 = vcmask 293888
      %v904 = vsel %vm903, %v867, 0
      %v906 = vsel %vm903, %v869, 0
      %v908 = vsel %vm903, %v871, 0
      %v910 = vsel %vm903, %v873, 0
      %v912 = vsel %vm903, %v875, 0
      %vm914 = vcmask 1041408
      %v916 = vsel %vm914, %v900, 0
      %918 = vmatprep.subr.bf16.mxu0 0
      %919 = vmatpush1.bf16.msra.mxu0 %v898
      %920 = vmatprep.subr.bf16.mxu0 0
      %921 = vmatpush1.bf16.msra.mxu0 %v899
      %922 = vmatprep.subr.bf16.mxu0 0
      %923 = vmatpush1.bf16.msra.mxu0 %v916
      %924 = vmatprep.subr.bf16.mxu0 0
      %925 = vmatpush1.bf16.msra.mxu0 0
      %926 = vmatprep.subr.bf16.mxu0 0
      %927 = vmatpush1.bf16.msra.mxu0 0
      %928 = vmatprep.subr.bf16.mxu0 0
      %929 = vmatpush1.bf16.msra.mxu0 0
      %930 = vmatprep.subr.bf16.mxu0 0
      %931 = vmatpush1.bf16.msra.mxu0 0
      %932 = vmatprep.subr.bf16.mxu0 0
      %933 = vmatpush1.bf16.msra.mxu0 0
      %934 = vmatprep.subr.bf16.mxu0 0
      %935 = vmatpush1.bf16.msra.mxu0 0
      %936 = vmatprep.subr.bf16.mxu0 0
      %937 = vmatpush1.bf16.msra.mxu0 0
      %938 = vmatprep.subr.bf16.mxu0 0
      %939 = vmatpush1.bf16.msra.mxu0 0
      %940 = vmatprep.subr.bf16.mxu0 0
      %941 = vmatpush1.bf16.msra.mxu0 0
      %942 = vmatprep.subr.bf16.mxu0 0
      %943 = vmatpush1.bf16.msra.mxu0 0
      %944 = vmatprep.subr.bf16.mxu0 0
      %945 = vmatpush1.bf16.msra.mxu0 0
      %946 = vmatprep.subr.bf16.mxu0 0
      %947 = vmatpush1.bf16.msra.mxu0 0
      %948 = vmatprep.subr.bf16.mxu0 0
      %949 = vmatpush1.bf16.msra.mxu0 0
      %950 = vmatprep.mubr.bf16.mxu0 0
      %951 = vmatmul.mubr.bf16.gmra.mrb[0].mxu0 %v904
      %v952 = vpop.f32.mrb[0].mxu0
      %v953 = vadd.f32 %v886, %v952
      %v954 = vpop.f32.mrb[0].mxu0
      %v955 = vpop.f32.mrb[0].mxu0
      %v956 = vadd.f32 %v886, %v955
      %v957 = vpop.f32.mrb[0].mxu0
      %958 = vmatprep.mubr.bf16.mxu0 0
      %959 = vmatmul.mubr.bf16.gmra.mrb[0].mxu0 %v906
      %v960 = vpop.f32.mrb[0].mxu0
      %v961 = vadd.f32 %v886, %v960
      %v962 = vpop.f32.mrb[0].mxu0
      %v963 = vpop.f32.mrb[0].mxu0
      %v964 = vadd.f32 %v886, %v963
      %v965 = vpop.f32.mrb[0].mxu0
      %966 = vmatprep.mubr.bf16.mxu0 0
      %967 = vmatmul.mubr.bf16.gmra.mrb[0].mxu0 %v908
      %v968 = vpop.f32.mrb[0].mxu0
      %v969 = vadd.f32 %v886, %v968
      %v970 = vpop.f32.mrb[0].mxu0
      %v971 = vpop.f32.mrb[0].mxu0
      %v972 = vadd.f32 %v886, %v971
      %v973 = vpop.f32.mrb[0].mxu0
      %974 = vmatprep.mubr.bf16.mxu0 0
      %975 = vmatmul.mubr.bf16.gmra.mrb[0].mxu0 %v910
      %v976 = vpop.f32.mrb[0].mxu0
      %v977 = vadd.f32 %v886, %v976
      %v978 = vpop.f32.mrb[0].mxu0
      %v979 = vpop.f32.mrb[0].mxu0
      %v980 = vadd.f32 %v886, %v979
      %v981 = vpop.f32.mrb[0].mxu0
      %982 = vmatprep.mubr.bf16.mxu0 0
      %983 = vmatmul.mubr.bf16.gmra.mrb[0].mxu0 %v912
      %v984 = vpop.f32.mrb[0].mxu0
      %v985 = vadd.f32 %v886, %v984
      %v986 = vpop.f32.mrb[0].mxu0
      %v987 = vpop.f32.mrb[0].mxu0
      %v988 = vadd.f32 %v886, %v987
      %v989 = vpop.f32.mrb[0].mxu0
      %990 = vdwg.mxu0
      %v991 = vmax.f32 %v953, 0.0
      %v992 = vmax.f32 %v956, 0.0
      %v993 = vmax.f32 %v961, 0.0
      %v994 = vmax.f32 %v964, 0.0
      %v995 = vmax.f32 %v969, 0.0
      %v996 = vmax.f32 %v972, 0.0
      %v997 = vmax.f32 %v977, 0.0
      %v998 = vmax.f32 %v980, 0.0
      %v999 = vmax.f32 %v985, 0.0
      %v1000 = vmax.f32 %v988, 0.0
      %v1001 = vlaneseq
      %v1002 = vshrl.u32 %v1001, 7
      %v1003 = vadd.s32 %v1002, 8
      %v1004 = vadd.s32 %v1002, 16
      %v1005 = vadd.s32 %v1002, 24
      %v1006 = vadd.s32 %v1002, 32
      %v1007 = vadd.s32 %v1002, 40
      %v1008 = vadd.s32 %v1002, 48
      %v1009 = vadd.s32 %v1002, 56
      %v1010 = vadd.s32 %v1002, 64
      %v1011 = vadd.s32 %v1002, 72
      %vm1012 = vcmp.lt.s32.totalorder %v1002, 0
      %v1013 = vsub.s32 0, %v1002
      %v1014 = vsel %vm1012, %v1013, %v1002
      %v1015 = vmul.u32.u64.compose %v1014, 3435973837
      %v1016 = vextract.low.u32 %v1015
      %v1017 = vextract.high.u32 %v1015
      %v1018 = vshrl.u32 %v1017, 3
      %v1019 = vmul.u32 %v1018, 10
      %v1020 = vsub.s32 %v1014, %v1019
      %v1021 = vsub.s32 0, %v1020
      %v1022 = vsel %vm1012, %v1021, %v1020
      %vm1023 = vcmp.lt.s32.totalorder %v1003, 0
      %v1024 = vsub.s32 0, %v1003
      %v1025 = vsel %vm1023, %v1024, %v1003
      %v1026 = vmul.u32.u64.compose %v1025, 3435973837
      %v1027 = vextract.low.u32 %v1026
      %v1028 = vextract.high.u32 %v1026
      %v1029 = vshrl.u32 %v1028, 3
      %v1030 = vmul.u32 %v1029, 10
      %v1031 = vsub.s32 %v1025, %v1030
      %v1032 = vsub.s32 0, %v1031
      %v1033 = vsel %vm1023, %v1032, %v1031
      %vm1034 = vcmp.lt.s32.totalorder %v1004, 0
      %v1035 = vsub.s32 0, %v1004
      %v1036 = vsel %vm1034, %v1035, %v1004
      %v1037 = vmul.u32.u64.compose %v1036, 3435973837
      %v1038 = vextract.low.u32 %v1037
      %v1039 = vextract.high.u32 %v1037
      %v1040 = vshrl.u32 %v1039, 3
      %v1041 = vmul.u32 %v1040, 10
      %v1042 = vsub.s32 %v1036, %v1041
      %v1043 = vsub.s32 0, %v1042
      %v1044 = vsel %vm1034, %v1043, %v1042
      %vm1045 = vcmp.lt.s32.totalorder %v1005, 0
      %v1046 = vsub.s32 0, %v1005
      %v1047 = vsel %vm1045, %v1046, %v1005
      %v1048 = vmul.u32.u64.compose %v1047, 3435973837
      %v1049 = vextract.low.u32 %v1048
      %v1050 = vextract.high.u32 %v1048
      %v1051 = vshrl.u32 %v1050, 3
      %v1052 = vmul.u32 %v1051, 10
      %v1053 = vsub.s32 %v1047, %v1052
      %v1054 = vsub.s32 0, %v1053
      %v1055 = vsel %vm1045, %v1054, %v1053
      %vm1056 = vcmp.lt.s32.totalorder %v1006, 0
      %v1057 = vsub.s32 0, %v1006
      %v1058 = vsel %vm1056, %v1057, %v1006
      %v1059 = vmul.u32.u64.compose %v1058, 3435973837
      %v1060 = vextract.low.u32 %v1059
      %v1061 = vextract.high.u32 %v1059
      %v1062 = vshrl.u32 %v1061, 3
      %v1063 = vmul.u32 %v1062, 10
      %v1064 = vsub.s32 %v1058, %v1063
      %v1065 = vsub.s32 0, %v1064
      %v1066 = vsel %vm1056, %v1065, %v1064
      %vm1067 = vcmp.lt.s32.totalorder %v1007, 0
      %v1068 = vsub.s32 0, %v1007
      %v1069 = vsel %vm1067, %v1068, %v1007
      %v1070 = vmul.u32.u64.compose %v1069, 3435973837
      %v1071 = vextract.low.u32 %v1070
      %v1072 = vextract.high.u32 %v1070
      %v1073 = vshrl.u32 %v1072, 3
      %v1074 = vmul.u32 %v1073, 10
      %v1075 = vsub.s32 %v1069, %v1074
      %v1076 = vsub.s32 0, %v1075
      %v1077 = vsel %vm1067, %v1076, %v1075
      %vm1078 = vcmp.lt.s32.totalorder %v1008, 0
      %v1079 = vsub.s32 0, %v1008
      %v1080 = vsel %vm1078, %v1079, %v1008
      %v1081 = vmul.u32.u64.compose %v1080, 3435973837
      %v1082 = vextract.low.u32 %v1081
      %v1083 = vextract.high.u32 %v1081
      %v1084 = vshrl.u32 %v1083, 3
      %v1085 = vmul.u32 %v1084, 10
      %v1086 = vsub.s32 %v1080, %v1085
      %v1087 = vsub.s32 0, %v1086
      %v1088 = vsel %vm1078, %v1087, %v1086
      %vm1089 = vcmp.lt.s32.totalorder %v1009, 0
      %v1090 = vsub.s32 0, %v1009
      %v1091 = vsel %vm1089, %v1090, %v1009
      %v1092 = vmul.u32.u64.compose %v1091, 3435973837
      %v1093 = vextract.low.u32 %v1092
      %v1094 = vextract.high.u32 %v1092
      %v1095 = vshrl.u32 %v1094, 3
      %v1096 = vmul.u32 %v1095, 10
      %v1097 = vsub.s32 %v1091, %v1096
      %v1098 = vsub.s32 0, %v1097
      %v1099 = vsel %vm1089, %v1098, %v1097
      %vm1100 = vcmp.lt.s32.totalorder %v1010, 0
      %v1101 = vsub.s32 0, %v1010
      %v1102 = vsel %vm1100, %v1101, %v1010
      %v1103 = vmul.u32.u64.compose %v1102, 3435973837
      %v1104 = vextract.low.u32 %v1103
      %v1105 = vextract.high.u32 %v1103
      %v1106 = vshrl.u32 %v1105, 3
      %v1107 = vmul.u32 %v1106, 10
      %v1108 = vsub.s32 %v1102, %v1107
      %v1109 = vsub.s32 0, %v1108
      %v1110 = vsel %vm1100, %v1109, %v1108
      %vm1111 = vcmp.lt.s32.totalorder %v1011, 0
      %v1112 = vsub.s32 0, %v1011
      %v1113 = vsel %vm1111, %v1112, %v1011
      %v1114 = vmul.u32.u64.compose %v1113, 3435973837
      %v1115 = vextract.low.u32 %v1114
      %v1116 = vextract.high.u32 %v1114
      %v1117 = vshrl.u32 %v1116, 3
      %v1118 = vmul.u32 %v1117, 10
      %v1119 = vsub.s32 %v1113, %v1118
      %v1120 = vsub.s32 0, %v1119
      %v1121 = vsel %vm1111, %v1120, %v1119
      %vm1122 = vcmp.ne.s32.totalorder %v1022, 0
      %vm1123 = vcmp.ne.s32.totalorder %v1033, 0
      %vm1124 = vcmp.ne.s32.totalorder %v1044, 0
      %vm1125 = vcmp.ne.s32.totalorder %v1055, 0
      %vm1126 = vcmp.ne.s32.totalorder %v1066, 0
      %vm1127 = vcmp.ne.s32.totalorder %v1077, 0
      %vm1128 = vcmp.ne.s32.totalorder %v1088, 0
      %vm1129 = vcmp.ne.s32.totalorder %v1099, 0
      %vm1130 = vcmp.ne.s32.totalorder %v1110, 0
      %vm1131 = vcmp.ne.s32.totalorder %v1121, 0
      %vm1132 = vcmp.lt.s32.totalorder %v1022, 0
      %vm1133 = vcmp.lt.s32.totalorder %v1033, 0
      %vm1134 = vcmp.lt.s32.totalorder %v1044, 0
      %vm1135 = vcmp.lt.s32.totalorder %v1055, 0
      %vm1136 = vcmp.lt.s32.totalorder %v1066, 0
      %vm1137 = vcmp.lt.s32.totalorder %v1077, 0
      %vm1138 = vcmp.lt.s32.totalorder %v1088, 0
      %vm1139 = vcmp.lt.s32.totalorder %v1099, 0
      %vm1140 = vcmp.lt.s32.totalorder %v1110, 0
      %vm1141 = vcmp.lt.s32.totalorder %v1121, 0
      %vm1142 = vmand %vm1132, %vm1122
      %vm1143 = vmand %vm1133, %vm1123
      %vm1144 = vmand %vm1134, %vm1124
      %vm1145 = vmand %vm1135, %vm1125
      %vm1146 = vmand %vm1136, %vm1126
      %vm1147 = vmand %vm1137, %vm1127
      %vm1148 = vmand %vm1138, %vm1128
      %vm1149 = vmand %vm1139, %vm1129
      %vm1150 = vmand %vm1140, %vm1130
      %vm1151 = vmand %vm1141, %vm1131
      %v1152 = vadd.s32 %v1022, 10
      %v1153 = vadd.s32 %v1033, 10
      %v1154 = vadd.s32 %v1044, 10
      %v1155 = vadd.s32 %v1055, 10
      %v1156 = vadd.s32 %v1066, 10
      %v1157 = vadd.s32 %v1077, 10
      %v1158 = vadd.s32 %v1088, 10
      %v1159 = vadd.s32 %v1099, 10
      %v1160 = vadd.s32 %v1110, 10
      %v1161 = vadd.s32 %v1121, 10
      %v1162 = vsel %vm1142, %v1152, %v1022
      %v1163 = vsel %vm1143, %v1153, %v1033
      %v1164 = vsel %vm1144, %v1154, %v1044
      %v1165 = vsel %vm1145, %v1155, %v1055
      %v1166 = vsel %vm1146, %v1156, %v1066
      %v1167 = vsel %vm1147, %v1157, %v1077
      %v1168 = vsel %vm1148, %v1158, %v1088
      %v1169 = vsel %vm1149, %v1159, %v1099
      %v1170 = vsel %vm1150, %v1160, %v1110
      %v1171 = vsel %vm1151, %v1161, %v1121
      %vm1172 = vcmp.lt.s32.totalorder %v1162, 8
      %vm1173 = vcmp.lt.s32.totalorder %v1163, 8
      %vm1174 = vcmp.lt.s32.totalorder %v1164, 8
      %vm1175 = vcmp.lt.s32.totalorder %v1165, 8
      %vm1176 = vcmp.lt.s32.totalorder %v1166, 8
      %vm1177 = vcmp.lt.s32.totalorder %v1167, 8
      %vm1178 = vcmp.lt.s32.totalorder %v1168, 8
      %vm1179 = vcmp.lt.s32.totalorder %v1169, 8
      %vm1180 = vcmp.lt.s32.totalorder %v1170, 8
      %vm1181 = vcmp.lt.s32.totalorder %v1171, 8
      %v1182 = vsel %vm1172, 1, 0
      %v1183 = vsel %vm1173, 1, 0
      %v1184 = vsel %vm1174, 1, 0
      %v1185 = vsel %vm1175, 1, 0
      %v1186 = vsel %vm1176, 1, 0
      %v1187 = vsel %vm1177, 1, 0
      %v1188 = vsel %vm1178, 1, 0
      %v1189 = vsel %vm1179, 1, 0
      %v1190 = vsel %vm1180, 1, 0
      %v1191 = vsel %vm1181, 1, 0
      %vm1192 = vcmp.eq.s32.totalorder %v1182, 1
      %vm1193 = vcmp.eq.s32.totalorder %v1183, 1
      %vm1194 = vcmp.eq.s32.totalorder %v1184, 1
      %vm1195 = vcmp.eq.s32.totalorder %v1185, 1
      %vm1196 = vcmp.eq.s32.totalorder %v1186, 1
      %vm1197 = vcmp.eq.s32.totalorder %v1187, 1
      %vm1198 = vcmp.eq.s32.totalorder %v1188, 1
      %vm1199 = vcmp.eq.s32.totalorder %v1189, 1
      %vm1200 = vcmp.eq.s32.totalorder %v1190, 1
      %vm1201 = vcmp.eq.s32.totalorder %v1191, 1
      %v1202 = vsel %vm1192, %v991, 0.0
      %v1203 = vsel %vm1193, %v992, 0.0
      %v1204 = vsel %vm1194, %v993, 0.0
      %v1205 = vsel %vm1195, %v994, 0.0
      %v1206 = vsel %vm1196, %v995, 0.0
      %v1207 = vsel %vm1197, %v996, 0.0
      %v1208 = vsel %vm1198, %v997, 0.0
      %v1209 = vsel %vm1199, %v998, 0.0
      %v1210 = vsel %vm1200, %v999, 0.0
      %v1211 = vsel %vm1201, %v1000, 0.0
      %v1212 = vpack.c.bf16 %v1203, %v1202
      %v1213 = vpack.c.bf16 %v1205, %v1204
      %v1214 = vpack.c.bf16 %v1207, %v1206
      %v1215 = vpack.c.bf16 %v1209, %v1208
      %v1216 = vpack.c.bf16 %v1211, %v1210
      %v1218 = vshrl.u32 %v1212, 16
      %v1220 = vrot.slane %v1218, 2
      %v1221 = vshll.u32 %v1212, 16
      %v1223 = vrot.slane %v1221, 3
      %v1224 = vor.u32 %v1220, %v1223
      %v1226 = vshrl.u32 %v1213, 16
      %v1228 = vrot.slane %v1226, 2
      %v1229 = vshll.u32 %v1213, 16
      %v1231 = vrot.slane %v1229, 3
      %v1232 = vor.u32 %v1228, %v1231
      %v1233 = vsel %vm722, %v1224, %v1232
      %v1235 = vshrl.u32 %v1214, 16
      %v1237 = vrot.slane %v1235, 2
      %v1238 = vshll.u32 %v1214, 16
      %v1240 = vrot.slane %v1238, 3
      %v1241 = vor.u32 %v1237, %v1240
      %v1242 = vsel %vm722, %v1232, %v1241
      %v1244 = vshrl.u32 %v1215, 16
      %v1246 = vrot.slane %v1244, 2
      %v1247 = vshll.u32 %v1215, 16
      %v1249 = vrot.slane %v1247, 3
      %v1250 = vor.u32 %v1246, %v1249
      %v1251 = vsel %vm722, %v1241, %v1250
      %v1253 = vshrl.u32 %v1216, 16
      %v1255 = vrot.slane %v1253, 2
      %v1256 = vshll.u32 %v1216, 16
      %v1258 = vrot.slane %v1256, 3
      %v1259 = vor.u32 %v1255, %v1258
      %v1260 = vsel %vm722, %v1250, %v1259
      %vm1263 = vmand %vm675, %vm722
      %v1264 = vsel %vm1263, 0, %v1224
      %v1265 = vsel %vm1263, %v1259, 0
      %v1267 = vshrl.u32 %v1264, 16
      %v1269 = vshll.u32 %v1264, 16
      %v1271 = vrot.slane %v1269, 1
      %v1272 = vor.u32 %v1267, %v1271
      %v1274 = vshll.u32 %v1233, 16
      %v1276 = vrot.slane %v1274, 1
      %v1277 = vsel %vm505, %v1272, %v1276
      %v1278 = vshrl.u32 %v1233, 16
      %v1280 = vor.u32 %v1278, %v1276
      %v1282 = vshll.u32 %v1242, 16
      %v1284 = vrot.slane %v1282, 1
      %v1285 = vsel %vm505, %v1280, %v1284
      %v1286 = vshrl.u32 %v1242, 16
      %v1288 = vor.u32 %v1286, %v1284
      %v1290 = vshll.u32 %v1251, 16
      %v1292 = vrot.slane %v1290, 1
      %v1293 = vsel %vm505, %v1288, %v1292
      %v1294 = vshrl.u32 %v1251, 16
      %v1296 = vor.u32 %v1294, %v1292
      %v1298 = vshll.u32 %v1260, 16
      %v1300 = vrot.slane %v1298, 1
      %v1301 = vsel %vm505, %v1296, %v1300
      %v1302 = vshrl.u32 %v1260, 16
      %v1304 = vor.u32 %v1302, %v1300
      %v1306 = vshll.u32 %v1265, 16
      %v1308 = vrot.slane %v1306, 1
      %v1309 = vsel %vm505, %v1304, %v1308
      %1310 = vrot.lane.b32.xlu0 %v1277, 8
      %v1311 = vpop.permute.xlu0 %1310
      %1312 = vrot.lane.b32.xlu0 %v1285, 8
      %v1313 = vpop.permute.xlu0 %1312
      %1314 = vrot.lane.b32.xlu0 %v1293, 8
      %v1315 = vpop.permute.xlu0 %1314
      %1316 = vrot.lane.b32.xlu0 %v1301, 8
      %v1317 = vpop.permute.xlu0 %1316
      %1318 = vrot.lane.b32.xlu0 %v1309, 8
      %v1319 = vpop.permute.xlu0 %1318
      %v1322 = vrot.slane %v1264, 1
      %v1323 = vrot.slane %v1233, 1
      %v1324 = vsel %vm560, %v1322, %v1323
      %v1325 = vrot.slane %v1242, 1
      %v1326 = vsel %vm560, %v1323, %v1325
      %v1327 = vrot.slane %v1251, 1
      %v1328 = vsel %vm560, %v1325, %v1327
      %v1329 = vrot.slane %v1260, 1
      %v1330 = vsel %vm560, %v1327, %v1329
      %v1331 = vrot.slane %v1265, 1
      %v1332 = vsel %vm560, %v1329, %v1331
      %1333 = vrot.lane.b32.xlu0 %v1324, 16
      %v1334 = vpop.permute.xlu0 %1333
      %1335 = vrot.lane.b32.xlu0 %v1326, 16
      %v1336 = vpop.permute.xlu0 %1335
      %1337 = vrot.lane.b32.xlu0 %v1328, 16
      %v1338 = vpop.permute.xlu0 %1337
      %1339 = vrot.lane.b32.xlu0 %v1330, 16
      %v1340 = vpop.permute.xlu0 %1339
      %1341 = vrot.lane.b32.xlu0 %v1332, 16
      %v1342 = vpop.permute.xlu0 %1341
      %vm1343 = vcmask 1042432
      %v1344 = vrot.slane %v1264, 5
      %v1345 = vrot.slane %v1233, 5
      %v1346 = vsel %vm1343, %v1344, %v1345
      %v1347 = vrot.slane %v1242, 5
      %v1348 = vsel %vm1343, %v1345, %v1347
      %v1349 = vrot.slane %v1251, 5
      %v1350 = vsel %vm1343, %v1347, %v1349
      %v1351 = vrot.slane %v1260, 5
      %v1352 = vsel %vm1343, %v1349, %v1351
      %v1353 = vrot.slane %v1265, 5
      %v1354 = vsel %vm1343, %v1351, %v1353
      %1355 = vrot.lane.b32.xlu0 %v1346, 24
      %v1356 = vpop.permute.xlu0 %1355
      %1357 = vrot.lane.b32.xlu0 %v1348, 24
      %v1358 = vpop.permute.xlu0 %1357
      %1359 = vrot.lane.b32.xlu0 %v1350, 24
      %v1360 = vpop.permute.xlu0 %1359
      %1361 = vrot.lane.b32.xlu0 %v1352, 24
      %v1362 = vpop.permute.xlu0 %1361
      %1363 = vrot.lane.b32.xlu0 %v1354, 24
      %v1364 = vpop.permute.xlu0 %1363
      %vm1365 = vsmask.f32 2304
      %v1366 = vrot.slane %v1267, 5
      %v1367 = vrot.slane %v1269, 6
      %v1368 = vor.u32 %v1366, %v1367
      %v1369 = vrot.slane %v1278, 5
      %v1370 = vrot.slane %v1274, 6
      %v1371 = vor.u32 %v1369, %v1370
      %v1372 = vsel %vm1365, %v1368, %v1371
      %v1373 = vrot.slane %v1286, 5
      %v1374 = vrot.slane %v1282, 6
      %v1375 = vor.u32 %v1373, %v1374
      %v1376 = vsel %vm1365, %v1371, %v1375
      %v1377 = vrot.slane %v1294, 5
      %v1378 = vrot.slane %v1290, 6
      %v1379 = vor.u32 %v1377, %v1378
      %v1380 = vsel %vm1365, %v1375, %v1379
      %v1381 = vrot.slane %v1302, 5
      %v1382 = vrot.slane %v1298, 6
      %v1383 = vor.u32 %v1381, %v1382
      %v1384 = vsel %vm1365, %v1379, %v1383
      %v1385 = vshrl.u32 %v1265, 16
      %v1387 = vrot.slane %v1385, 5
      %v1388 = vrot.slane %v1306, 6
      %v1389 = vor.u32 %v1387, %v1388
      %v1390 = vsel %vm1365, %v1383, %v1389
      %1391 = vrot.lane.b32.xlu0 %v1372, 32
      %v1392 = vpop.permute.xlu0 %1391
      %1393 = vrot.lane.b32.xlu0 %v1376, 32
      %v1394 = vpop.permute.xlu0 %1393
      %1395 = vrot.lane.b32.xlu0 %v1380, 32
      %v1396 = vpop.permute.xlu0 %1395
      %1397 = vrot.lane.b32.xlu0 %v1384, 32
      %v1398 = vpop.permute.xlu0 %1397
      %1399 = vrot.lane.b32.xlu0 %v1390, 32
      %v1400 = vpop.permute.xlu0 %1399
      %vm1401 = vcmask 1041408
      %v1402 = vrot.slane %v1264, 6
      %v1403 = vrot.slane %v1233, 6
      %v1404 = vsel %vm1401, %v1402, %v1403
      %v1405 = vrot.slane %v1242, 6
      %v1406 = vsel %vm1401, %v1403, %v1405
      %v1407 = vrot.slane %v1251, 6
      %v1408 = vsel %vm1401, %v1405, %v1407
      %v1409 = vrot.slane %v1260, 6
      %v1410 = vsel %vm1401, %v1407, %v1409
      %v1411 = vrot.slane %v1265, 6
      %v1412 = vsel %vm1401, %v1409, %v1411
      %1413 = vrot.lane.b32.xlu0 %v1404, 40
      %v1414 = vpop.permute.xlu0 %1413
      %1415 = vrot.lane.b32.xlu0 %v1406, 40
      %v1416 = vpop.permute.xlu0 %1415
      %1417 = vrot.lane.b32.xlu0 %v1408, 40
      %v1418 = vpop.permute.xlu0 %1417
      %1419 = vrot.lane.b32.xlu0 %v1410, 40
      %v1420 = vpop.permute.xlu0 %1419
      %1421 = vrot.lane.b32.xlu0 %v1412, 40
      %v1422 = vpop.permute.xlu0 %1421
      %v1424 = vrot.slane %v1233, 2
      %v1425 = vrot.slane %v1242, 2
      %v1426 = vsel %vm675, %v1424, %v1425
      %v1427 = vrot.slane %v1251, 2
      %v1428 = vsel %vm675, %v1425, %v1427
      %v1429 = vrot.slane %v1260, 2
      %v1430 = vsel %vm675, %v1427, %v1429
      %v1431 = vrot.slane %v1265, 2
      %v1432 = vsel %vm675, %v1429, %v1431
      %v1433 = vrot.slane 0, 2
      %v1434 = vsel %vm675, %v1431, %v1433
      %1435 = vrot.lane.b32.xlu0 %v1426, 48
      %v1436 = vpop.permute.xlu0 %1435
      %1437 = vrot.lane.b32.xlu0 %v1428, 48
      %v1438 = vpop.permute.xlu0 %1437
      %1439 = vrot.lane.b32.xlu0 %v1430, 48
      %v1440 = vpop.permute.xlu0 %1439
      %1441 = vrot.lane.b32.xlu0 %v1432, 48
      %v1442 = vpop.permute.xlu0 %1441
      %1443 = vrot.lane.b32.xlu0 %v1434, 48
      %v1444 = vpop.permute.xlu0 %1443
      %v1445 = vrot.slane %v1278, 2
      %v1446 = vrot.slane %v1274, 3
      %v1447 = vor.u32 %v1445, %v1446
      %v1448 = vrot.slane %v1286, 2
      %v1449 = vrot.slane %v1282, 3
      %v1450 = vor.u32 %v1448, %v1449
      %v1451 = vsel %vm722, %v1447, %v1450
      %v1452 = vrot.slane %v1294, 2
      %v1453 = vrot.slane %v1290, 3
      %v1454 = vor.u32 %v1452, %v1453
      %v1455 = vsel %vm722, %v1450, %v1454
      %v1456 = vrot.slane %v1302, 2
      %v1457 = vrot.slane %v1298, 3
      %v1458 = vor.u32 %v1456, %v1457
      %v1459 = vsel %vm722, %v1454, %v1458
      %v1460 = vrot.slane %v1385, 2
      %v1461 = vrot.slane %v1306, 3
      %v1462 = vor.u32 %v1460, %v1461
      %v1463 = vsel %vm722, %v1458, %v1462
      %v1465 = vshrl.u32 0, 16
      %v1467 = vrot.slane %v1465, 2
      %v1468 = vshll.u32 0, 16
      %v1470 = vrot.slane %v1468, 3
      %v1471 = vor.u32 %v1467, %v1470
      %v1472 = vsel %vm722, %v1462, %v1471
      %1473 = vrot.lane.b32.xlu0 %v1451, 56
      %v1474 = vpop.permute.xlu0 %1473
      %1475 = vrot.lane.b32.xlu0 %v1455, 56
      %v1476 = vpop.permute.xlu0 %1475
      %1477 = vrot.lane.b32.xlu0 %v1459, 56
      %v1478 = vpop.permute.xlu0 %1477
      %1479 = vrot.lane.b32.xlu0 %v1463, 56
      %v1480 = vpop.permute.xlu0 %1479
      %1481 = vrot.lane.b32.xlu0 %v1472, 56
      %v1482 = vpop.permute.xlu0 %1481
      %v1483 = vrot.slane %v1233, 3
      %v1484 = vrot.slane %v1242, 3
      %v1485 = vsel %vm766, %v1483, %v1484
      %v1486 = vrot.slane %v1251, 3
      %v1487 = vsel %vm766, %v1484, %v1486
      %v1488 = vrot.slane %v1260, 3
      %v1489 = vsel %vm766, %v1486, %v1488
      %v1490 = vrot.slane %v1265, 3
      %v1491 = vsel %vm766, %v1488, %v1490
      %v1492 = vrot.slane 0, 3
      %v1493 = vsel %vm766, %v1490, %v1492
      %1494 = vrot.lane.b32.xlu0 %v1485, 64
      %v1495 = vpop.permute.xlu0 %1494
      %1496 = vrot.lane.b32.xlu0 %v1487, 64
      %v1497 = vpop.permute.xlu0 %1496
      %1498 = vrot.lane.b32.xlu0 %v1489, 64
      %v1499 = vpop.permute.xlu0 %1498
      %1500 = vrot.lane.b32.xlu0 %v1491, 64
      %v1501 = vpop.permute.xlu0 %1500
      %1502 = vrot.lane.b32.xlu0 %v1493, 64
      %v1503 = vpop.permute.xlu0 %1502
      %v1505 = vsel %vm799, %v1264, %v1311
      %v1507 = vsel %vm799, %v1233, %v1313
      %v1509 = vsel %vm799, %v1242, %v1315
      %v1511 = vsel %vm799, %v1251, %v1317
      %v1513 = vsel %vm799, %v1260, %v1319
      %v1515 = vsel %vm821, %v1505, %v1334
      %v1517 = vsel %vm821, %v1507, %v1336
      %v1519 = vsel %vm821, %v1509, %v1338
      %v1521 = vsel %vm821, %v1511, %v1340
      %v1523 = vsel %vm821, %v1513, %v1342
      %v1525 = vsel %vm843, %v1515, %v1356
      %v1527 = vsel %vm843, %v1517, %v1358
      %v1529 = vsel %vm843, %v1519, %v1360
      %v1531 = vsel %vm843, %v1521, %v1362
      %v1533 = vsel %vm843, %v1523, %v1364
      %v1535 = vsel %vm865, %v1525, %v1392
      %v1537 = vsel %vm865, %v1527, %v1394
      %v1539 = vsel %vm865, %v1529, %v1396
      %v1541 = vsel %vm865, %v1531, %v1398
      %v1543 = vsel %vm865, %v1533, %v1400
      %vm1544 = vcmask 326656
      %v1546 = vsel %vm1544, %v1535, %v1414
      %v1548 = vsel %vm1544, %v1537, %v1416
      %v1550 = vsel %vm1544, %v1539, %v1418
      %v1552 = vsel %vm1544, %v1541, %v1420
      %v1554 = vsel %vm1544, %v1543, %v1422
      %vm1555 = vcmask 392192
      %v1557 = vsel %vm1555, %v1546, %v1436
      %v1559 = vsel %vm1555, %v1548, %v1438
      %v1561 = vsel %vm1555, %v1550, %v1440
      %v1563 = vsel %vm1555, %v1552, %v1442
      %v1565 = vsel %vm1555, %v1554, %v1444
      %vm1566 = vcmask 457728
      %v1568 = vsel %vm1566, %v1557, %v1474
      %v1570 = vsel %vm1566, %v1559, %v1476
      %v1572 = vsel %vm1566, %v1561, %v1478
      %v1574 = vsel %vm1566, %v1563, %v1480
      %v1576 = vsel %vm1566, %v1565, %v1482
      %vm1577 = vcmask 523264
      %v1579 = vsel %vm1577, %v1568, %v1495
      %v1581 = vsel %vm1577, %v1570, %v1497
      %v1583 = vsel %vm1577, %v1572, %v1499
      %v1585 = vsel %vm1577, %v1574, %v1501
      %v1587 = vsel %vm1577, %v1576, %v1503
      %v1588 = vld [vmem:[%s3] sm:$0xf]
      %v1589 = vld [vmem:[%s3 + $0x4] sm:$0xf]
      %v1590 = vld [vmem:[%s3 + $0x8] sm:$0xf]
      %v1591 = vld [vmem:[%s3 + $0xc] sm:$0xf]
      %v1592 = vld [vmem:[%s3 + $0x10] sm:$0xf]
      %v1593 = vld [vmem:[%s3 + $0x14] sm:$0xf]
      %v1594 = vld [vmem:[%s3 + $0x18] sm:$0xf]
      %v1595 = vld [vmem:[%s3 + $0x1c] sm:$0xf]
      %v1596 = vld [vmem:[%s3 + $0x20] sm:$0xf]
      %v1597 = vld [vmem:[%s4] sm:$0x1]
      %v1599 = vlaneseq
      %v1600 = vshrl.u32 %v1599, 7
      %v1601 = vsub.s32 0, %v1600
      %v1602 = vrot.slane %v1597, %v1601
      %v1613 = vunpack.c.l.b16 %v1588
      %v1614 = vunpack.c.l.b16 %v1589
      %v1615 = vunpack.c.l.b16 %v1590
      %v1616 = vunpack.c.l.b16 %v1591
      %v1617 = vunpack.c.l.b16 %v1592
      %v1618 = vunpack.c.l.b16 %v1593
      %v1619 = vunpack.c.l.b16 %v1594
      %v1620 = vunpack.c.l.b16 %v1595
      %v1621 = vunpack.c.l.b16 %v1596
      %v1622 = vpack.c.b16 %v1614, %v1613
      %v1623 = vpack.c.b16 %v1616, %v1615
      %v1624 = vpack.c.b16 %v1618, %v1617
      %v1625 = vpack.c.b16 %v1620, %v1619
      %v1626 = vpack.c.b16 %v1621, %v1621
      %vm1631 = vcmask 588800
      %v1632 = vsel %vm1631, %v1579, 0
      %v1634 = vsel %vm1631, %v1581, 0
      %v1636 = vsel %vm1631, %v1583, 0
      %v1638 = vsel %vm1631, %v1585, 0
      %v1640 = vsel %vm1631, %v1587, 0
      %vm1642 = vcmask 1043456
      %v1644 = vsel %vm1642, %v1626, 0
      %1646 = vmatprep.subr.bf16.mxu0 0
      %1647 = vmatpush1.bf16.msra.mxu0 %v1622
      %1648 = vmatprep.subr.bf16.mxu0 0
      %1649 = vmatpush1.bf16.msra.mxu0 %v1623
      %1650 = vmatprep.subr.bf16.mxu0 0
      %1651 = vmatpush1.bf16.msra.mxu0 %v1624
      %1652 = vmatprep.subr.bf16.mxu0 0
      %1653 = vmatpush1.bf16.msra.mxu0 %v1625
      %1654 = vmatprep.subr.bf16.mxu0 0
      %1655 = vmatpush1.bf16.msra.mxu0 %v1644
      %1656 = vmatprep.subr.bf16.mxu0 0
      %1657 = vmatpush1.bf16.msra.mxu0 0
      %1658 = vmatprep.subr.bf16.mxu0 0
      %1659 = vmatpush1.bf16.msra.mxu0 0
      %1660 = vmatprep.subr.bf16.mxu0 0
      %1661 = vmatpush1.bf16.msra.mxu0 0
      %1662 = vmatprep.subr.bf16.mxu0 0
      %1663 = vmatpush1.bf16.msra.mxu0 0
      %1664 = vmatprep.subr.bf16.mxu0 0
      %1665 = vmatpush1.bf16.msra.mxu0 0
      %1666 = vmatprep.subr.bf16.mxu0 0
      %1667 = vmatpush1.bf16.msra.mxu0 0
      %1668 = vmatprep.subr.bf16.mxu0 0
      %1669 = vmatpush1.bf16.msra.mxu0 0
      %1670 = vmatprep.subr.bf16.mxu0 0
      %1671 = vmatpush1.bf16.msra.mxu0 0
      %1672 = vmatprep.subr.bf16.mxu0 0
      %1673 = vmatpush1.bf16.msra.mxu0 0
      %1674 = vmatprep.subr.bf16.mxu0 0
      %1675 = vmatpush1.bf16.msra.mxu0 0
      %1676 = vmatprep.subr.bf16.mxu0 0
      %1677 = vmatpush1.bf16.msra.mxu0 0
      %1678 = vmatprep.mubr.bf16.mxu0 0
      %1679 = vmatmul.mubr.bf16.gmra.mrb[0].mxu0 %v1632
      %v1680 = vpop.f32.mrb[0].mxu0
      %v1681 = vadd.f32 %v1602, %v1680
      %v1682 = vpop.f32.mrb[0].mxu0
      %v1683 = vpop.f32.mrb[0].mxu0
      %v1684 = vadd.f32 %v1602, %v1683
      %v1685 = vpop.f32.mrb[0].mxu0
      %1686 = vmatprep.mubr.bf16.mxu0 0
      %1687 = vmatmul.mubr.bf16.gmra.mrb[0].mxu0 %v1634
      %v1688 = vpop.f32.mrb[0].mxu0
      %v1689 = vadd.f32 %v1602, %v1688
      %v1690 = vpop.f32.mrb[0].mxu0
      %v1691 = vpop.f32.mrb[0].mxu0
      %v1692 = vadd.f32 %v1602, %v1691
      %v1693 = vpop.f32.mrb[0].mxu0
      %1694 = vmatprep.mubr.bf16.mxu0 0
      %1695 = vmatmul.mubr.bf16.gmra.mrb[0].mxu0 %v1636
      %v1696 = vpop.f32.mrb[0].mxu0
      %v1697 = vadd.f32 %v1602, %v1696
      %v1698 = vpop.f32.mrb[0].mxu0
      %v1699 = vpop.f32.mrb[0].mxu0
      %v1700 = vadd.f32 %v1602, %v1699
      %v1701 = vpop.f32.mrb[0].mxu0
      %1702 = vmatprep.mubr.bf16.mxu0 0
      %1703 = vmatmul.mubr.bf16.gmra.mrb[0].mxu0 %v1638
      %v1704 = vpop.f32.mrb[0].mxu0
      %v1705 = vadd.f32 %v1602, %v1704
      %v1706 = vpop.f32.mrb[0].mxu0
      %v1707 = vpop.f32.mrb[0].mxu0
      %v1708 = vadd.f32 %v1602, %v1707
      %v1709 = vpop.f32.mrb[0].mxu0
      %1710 = vmatprep.mubr.bf16.mxu0 0
      %1711 = vmatmul.mubr.bf16.gmra.mrb[0].mxu0 %v1640
      %v1712 = vpop.f32.mrb[0].mxu0
      %v1713 = vadd.f32 %v1602, %v1712
      %v1714 = vpop.f32.mrb[0].mxu0
      %v1715 = vpop.f32.mrb[0].mxu0
      %v1716 = vadd.f32 %v1602, %v1715
      %v1717 = vpop.f32.mrb[0].mxu0
      %1718 = vdwg.mxu0
      %v1719 = vmax.f32 %v1681, 0.0
      %v1720 = vmax.f32 %v1684, 0.0
      %v1721 = vmax.f32 %v1689, 0.0
      %v1722 = vmax.f32 %v1692, 0.0
      %v1723 = vmax.f32 %v1697, 0.0
      %v1724 = vmax.f32 %v1700, 0.0
      %v1725 = vmax.f32 %v1705, 0.0
      %v1726 = vmax.f32 %v1708, 0.0
      %v1727 = vmax.f32 %v1713, 0.0
      %v1728 = vmax.f32 %v1716, 0.0
      %1729 = vst.msk [vmem:[%s224] sm:$0xff] %vm799, %v1719
      %1730 = vst.msk [vmem:[%s224 + $0x8] sm:$0xff] %vm799, %v1720
      %1731 = vst.msk [vmem:[%s224 + $0x10] sm:$0xff] %vm799, %v1721
      %1732 = vst.msk [vmem:[%s224 + $0x18] sm:$0xff] %vm799, %v1722
      %1733 = vst.msk [vmem:[%s224 + $0x20] sm:$0xff] %vm799, %v1723
      %1734 = vst.msk [vmem:[%s224 + $0x28] sm:$0xff] %vm799, %v1724
      %1735 = vst.msk [vmem:[%s224 + $0x30] sm:$0xff] %vm799, %v1725
      %1736 = vst.msk [vmem:[%s224 + $0x38] sm:$0xff] %vm799, %v1726
      %1737 = vst.msk [vmem:[%s224 + $0x40] sm:$0xff] %vm799, %v1727
      %1738 = vst.msk [vmem:[%s224 + $0x48] sm:$0xff] %vm799, %v1728
      %p1739 = scmp.lt.s32.totalorder %s16, 1
      %s1740 = scalar_select %p1739, %s16, 1
      %s1741 = smul.addr %s1740, 10
      %s1742 = smul.addr %s1741, 8
      %s1743 = scalar_lea.vmem %s5, %s1742
      // Predicated region
      $region41: #{tpu_custom_call.1} parent=39 // pred_check
        %p1744 = pneg %p144
      $region42: #{tpu_custom_call.1} parent=39 // pred_check_branch
        %1746 = sbr.rel (%p1744) target = $region44
      $region43: #{tpu_custom_call.1} parent=39 // pred_region
        _
      $region44: #{tpu_custom_call.1} parent=39 // pred_fallthru
        _
    $region40: #{tpu_custom_call.1} parent=5 // pred_fallthru
      _
    %p1747 = scmp.le.s32.totalorder 2, %s11
    // Predicated region
    $region45: #{tpu_custom_call.1} parent=5 // pred_check
      %p1748 = pneg %p1747
    $region46: #{tpu_custom_call.1} parent=5 // pred_check_branch
      %1750 = sbr.rel (%p1748) target = $region48
    $region47: #{tpu_custom_call.1} parent=5 // pred_region
      %s1751 = ssub.s32 %s11, 2
      // Predicated region
      $region49: #{tpu_custom_call.1} parent=47 // pred_check
        %p1752 = pneg %p150
      $region50: #{tpu_custom_call.1} parent=47 // pred_check_branch
        %1754 = sbr.rel (%p1752) target = $region52
      $region51: #{tpu_custom_call.1} parent=47 // pred_region
        %p1755 = scmp.lt.s32.totalorder %s17, 1
        %s1756 = scalar_select %p1755, %s17, 1
        %s1757 = smul.addr %s1756, 10
        %s1758 = smul.addr %s1757, 8
        %s1759 = scalar_lea.vmem %s5, %s1758
      $region52: #{tpu_custom_call.1} parent=47 // pred_fallthru
        _
    $region48: #{tpu_custom_call.1} parent=5 // pred_fallthru
      _
  $region6: #{tpu_custom_call.1} parent=0 // loop_footer
    %s15 = sadd.s32 1, %s11
  $region7: #{tpu_custom_call.1} parent=0 // loop_footer_branch
    %10 = sbr.rel target = $region3
  $region8: #{tpu_custom_call.1} parent=0 // loop_exit
    _

</llo_original>
